<compile_context>
chip_gen: v6e
topology: v6e:2x2x1
jax: 0.10.0
libtpu: 0.0.40
codegen_flags: <defaults>
</compile_context>

<pallas_src>
import functools
import math

import jax
import jax.numpy as jnp
import numpy as np
from jax import lax
from jax.experimental import pallas as pl
from jax.experimental.pallas import tpu as pltpu

# ----------------------------- config ---------------------------------------
B = 2           # batch
N = 8           # sequence length
D = 64          # embedding dim (module `dim`), divisible by NUM_HEADS
NUM_HEADS = 8   # module default
DH = D // NUM_HEADS

# MXU operand dtype. bf16 operands + f32 accumulation give full-rate MXU on
# v6e/v7x and halve weight-DMA bytes; element-wise math stays f32 (v5e has no
# bf16 VPU/EUP path).  Set to jnp.float32 for bit-exact f32 verification.
MXU_DTYPE = jnp.bfloat16


# ----------------------------- kernel ---------------------------------------
def _intra_mha_kernel(x_ref, wqkv_ref, bqkv_ref, wp_ref, bp_ref, out_ref, *, num_heads):
    b, n, d = x_ref.shape
    h = num_heads
    dh = d // h
    mxu_dt = wqkv_ref.dtype

    x2 = x_ref[...].reshape(b * n, d)                                   # (BN, D) f32

    # ---- fused QKV projection: ONE MXU issue for Q, K and V -----------------
    qkv = jnp.dot(x2.astype(mxu_dt), wqkv_ref[...],
                  preferred_element_type=jnp.float32) + bqkv_ref[...]    # (BN, 3D) f32

    # Gather per-(tensor, head) lane slices into head-batched (H*B, N, DH)
    # operands (leading batch index = h*B + b).  Static lane slices and
    # major-axis concatenation only — compiles cleanly, no sublane transposes.
    def heads(col_off):
        parts = [qkv[:, col_off + i * dh: col_off + (i + 1) * dh].reshape(b, n, dh)
                 for i in range(h)]
        return jnp.concatenate(parts, axis=0)                            # (H*B, N, DH) f32

    qh = heads(0 * d).astype(mxu_dt)
    kh = heads(1 * d).astype(mxu_dt)
    vh = heads(2 * d).astype(mxu_dt)

    # ---- attention: all (batch, head) pairs in two batched MXU ops ----------
    energy = jnp.einsum('bqd,bkd->bqk', qh, kh,
                        preferred_element_type=jnp.float32)              # (H*B, N, N) f32

    # softmax in f32; divide runs on the EUP via approximate reciprocal.
    # The torch module's post-softmax 1/sqrt(emb_size) is folded into wp.
    mx = jnp.max(energy, axis=-1, keepdims=True)
    ex = jnp.exp(energy - mx)
    att = ex * pl.reciprocal(jnp.sum(ex, axis=-1, keepdims=True), approx=True)
    # TODO(synk): optional attention mask (forward arg, default None) and att_drop
    # (dropout=0 -> identity) are omitted.

    ctx = jnp.einsum('bqk,bkd->bqd', att.astype(mxu_dt), vh,
                     preferred_element_type=jnp.float32)                 # (H*B, N, DH) f32

    # back to (BN, D) with head-major lanes: 'b h n d -> b n (h d)'
    ctx2 = jnp.concatenate(
        [ctx[i * b:(i + 1) * b].reshape(b * n, dh) for i in range(h)], axis=-1)

    # ---- output projection (1/sqrt(emb_size) pre-folded into wp) ------------
    y = jnp.dot(ctx2.astype(mxu_dt), wp_ref[...],
                preferred_element_type=jnp.float32) + bp_ref[...]        # (BN, D) f32
    out_ref[...] = y.reshape(b, n, d).astype(out_ref.dtype)


# ----------------------------- wrapper ---------------------------------------
def intra_multi_head_attention(x, kparams):
    """x: (B, N, D) f32. kparams: fused / pre-transposed kernel weights."""
    bx, nx, dx = x.shape
    ordered = [kparams["wqkv"], kparams["bqkv"], kparams["wp"], kparams["bp"]]

    def full_spec(a):
        nd = a.ndim
        return pl.BlockSpec(a.shape, lambda i, _nd=nd: (0,) * _nd)

    kernel = functools.partial(_intra_mha_kernel, num_heads=NUM_HEADS)

    return pl.pallas_call(
        kernel,
        out_shape=jax.ShapeDtypeStruct((bx, nx, dx), x.dtype),
        # Single grid step: the whole (B, N, D) batch plus ~33 KB of weights is
        # resident in VMEM at once, weights are DMA'd exactly once, and there is
        # no per-step launch overhead.  "arbitrary" keeps it on one TensorCore
        # on v7x (a 2-TC split would only duplicate weight DMA at this size).
        grid=(1,),
        in_specs=[pl.BlockSpec((bx, nx, dx), lambda i: (0, 0, 0))]
                 + [full_spec(a) for a in ordered],
        out_specs=pl.BlockSpec((bx, nx, dx), lambda i: (0, 0, 0)),
        compiler_params=pltpu.CompilerParams(dimension_semantics=("arbitrary",)),
    )(x, *ordered)


# ------------------------- param construction --------------------------------
def make_torch_params(key):
    """Deterministic init with the PyTorch module's parameter shapes (torch layout)."""
    ks = jax.random.split(key, 4)
    s = 0.05
    return dict(
        w_qkv=s * jax.random.normal(ks[0], (3 * D, D), jnp.float32),   # (out, in)
        b_qkv=s * jax.random.normal(ks[1], (3 * D,), jnp.float32),
        w_proj=s * jax.random.normal(ks[2], (D, D), jnp.float32),
        b_proj=s * jax.random.normal(ks[3], (D,), jnp.float32),
    )


def pack_kernel_params(p):
    """Fuse / pre-transpose / fold torch weights for the kernel.

    The torch qkv Linear output channel decomposes as c = (h*DH + d)*3 + t per
    the rearrange 'b n (h d qkv) -> qkv b h n d'.  Columns are gathered into a
    single (D, 3D) weight ordered (t, h, d) so the kernel extracts Q/K/V heads
    with static lane slices.  The post-softmax 1/sqrt(emb_size) is folded into
    the projection weight only (exact, since att_drop is identity).
    """
    base = ((np.arange(NUM_HEADS)[:, None] * DH + np.arange(DH)[None, :]) * 3).reshape(-1)
    cols = np.concatenate([base + 0, base + 1, base + 2])      # (3D,) in (t, h, d) order
    inv_scale = 1.0 / math.sqrt(float(D))                      # emb_size ** 0.5 (post-softmax)
    return dict(
        wqkv=jnp.asarray(p["w_qkv"])[cols].T.astype(MXU_DTYPE),     # (D, 3D) MXU dtype
        bqkv=jnp.asarray(p["b_qkv"])[cols].reshape(1, 3 * D),       # f32
        wp=(p["w_proj"].T * inv_scale).astype(MXU_DTYPE),           # (D, D) MXU dtype
        bp=p["b_proj"].reshape(1, D),                               # f32 (not scaled)
    )


# ----------------------------- reference -------------------------------------
def reference(x, p):
    """Direct f32 JAX translation of IntraMultiHeadAttention.forward (eval)."""
    hp = lax.Precision.HIGHEST
    qkv = jnp.dot(x, p["w_qkv"].T, precision=hp) + p["b_qkv"]            # (B, N, 3D)
    qkv = qkv.reshape(B, N, NUM_HEADS, DH, 3)                            # (h d qkv)
    qkv = jnp.moveaxis(qkv, -1, 0)                                       # (qkv, B, N, H, DH)
    q, k, v = (jnp.transpose(t, (0, 2, 1, 3)) for t in (qkv[0], qkv[1], qkv[2]))
    energy = jnp.einsum('bhqd,bhkd->bhqk', q, k, precision=hp)
    att = jax.nn.softmax(energy, axis=-1) / math.sqrt(float(D))
    out = jnp.einsum('bhal,bhlv->bhav', att, v, precision=hp)
    out = jnp.transpose(out, (0, 2, 1, 3)).reshape(B, N, D)
    return jnp.dot(out, p["w_proj"].T, precision=hp) + p["b_proj"]


# ------------------------------- main -----------------------------------------
if __name__ == "__main__":
    key = jax.random.PRNGKey(0)
    kx, kp = jax.random.split(key)
    x = jax.random.normal(kx, (B, N, D), jnp.float32)

    torch_params = make_torch_params(kp)
    kparams = pack_kernel_params(torch_params)

    out = intra_multi_head_attention(x, kparams)
    out = jax.block_until_ready(out)

    ref = reference(x, torch_params)
    # bf16 MXU operands (f32 accumulation) -> small deviation vs the f32 reference.
    np.testing.assert_allclose(np.asarray(out), np.asarray(ref), rtol=3e-3, atol=3e-3)
    print("KERNEL_OK")
</pallas_src>

<mosaic_0001>
module attributes {stable_mosaic.version = 11 : i64} {
  func.func @_intra_mha_kernel(%arg0: i32, %arg1: memref<2x8x64xf32, #tpu.memory_space<vmem>>, %arg2: memref<64x192xbf16, #tpu.memory_space<vmem>>, %arg3: memref<1x192xf32, #tpu.memory_space<vmem>>, %arg4: memref<64x64xbf16, #tpu.memory_space<vmem>>, %arg5: memref<1x64xf32, #tpu.memory_space<vmem>>, %arg6: memref<2x8x64xf32, #tpu.memory_space<vmem>>) attributes {dimension_semantics = [#tpu.dimension_semantics<arbitrary>], iteration_bounds = array<i64: 1>, scalar_prefetch = 0 : i64, scratch_operands = 0 : i64, tpu.core_type = #tpu.core_type<tc>, window_params = [{pipeline_mode = #tpu.pipeline_mode<synchronous>, transform_indices = @transform_0, window_bounds = array<i64: 2, 8, 64>}, {pipeline_mode = #tpu.pipeline_mode<synchronous>, transform_indices = @transform_1, window_bounds = array<i64: 64, 192>}, {pipeline_mode = #tpu.pipeline_mode<synchronous>, transform_indices = @transform_2, window_bounds = array<i64: 1, 192>}, {pipeline_mode = #tpu.pipeline_mode<synchronous>, transform_indices = @transform_3, window_bounds = array<i64: 64, 64>}, {pipeline_mode = #tpu.pipeline_mode<synchronous>, transform_indices = @transform_4, window_bounds = array<i64: 1, 64>}, {pipeline_mode = #tpu.pipeline_mode<synchronous>, transform_indices = @transform_5, window_bounds = array<i64: 2, 8, 64>}]} {
    %c0 = arith.constant 0 : index
    %c0_0 = arith.constant 0 : index
    %c0_1 = arith.constant 0 : index
    %0 = vector.load %arg1[%c0, %c0_0, %c0_1] : memref<2x8x64xf32, #tpu.memory_space<vmem>>, vector<2x8x64xf32>
    %1 = vector.shape_cast %0 : vector<2x8x64xf32> to vector<16x64xf32>
    %2 = arith.truncf %1 : vector<16x64xf32> to vector<16x64xbf16>
    %c0_2 = arith.constant 0 : index
    %c0_3 = arith.constant 0 : index
    %3 = vector.load %arg2[%c0_2, %c0_3] : memref<64x192xbf16, #tpu.memory_space<vmem>>, vector<64x192xbf16>
    %cst = arith.constant dense<0.000000e+00> : vector<16x192xf32>
    %4 = tpu.matmul %2, %3, %cst {dimension_numbers = #tpu.dot_dimension_numbers<[1], [0], [0], [1], [0, 0, 1, 1], [], []>} : vector<16x64xbf16>, vector<64x192xbf16>, vector<16x192xf32> -> vector<16x192xf32>
    %c0_4 = arith.constant 0 : index
    %c0_5 = arith.constant 0 : index
    %5 = vector.load %arg3[%c0_4, %c0_5] : memref<1x192xf32, #tpu.memory_space<vmem>>, vector<1x192xf32>
    %6 = vector.broadcast %5 : vector<1x192xf32> to vector<16x192xf32>
    %7 = arith.addf %4, %6 : vector<16x192xf32>
    %8 = vector.extract_strided_slice %7 {offsets = [0, 0], sizes = [16, 8], strides = [1, 1]} : vector<16x192xf32> to vector<16x8xf32>
    %9 = vector.shape_cast %8 : vector<16x8xf32> to vector<2x8x8xf32>
    %10 = vector.extract_strided_slice %7 {offsets = [0, 8], sizes = [16, 8], strides = [1, 1]} : vector<16x192xf32> to vector<16x8xf32>
    %11 = vector.shape_cast %10 : vector<16x8xf32> to vector<2x8x8xf32>
    %12 = vector.extract_strided_slice %7 {offsets = [0, 16], sizes = [16, 8], strides = [1, 1]} : vector<16x192xf32> to vector<16x8xf32>
    %13 = vector.shape_cast %12 : vector<16x8xf32> to vector<2x8x8xf32>
    %14 = vector.extract_strided_slice %7 {offsets = [0, 24], sizes = [16, 8], strides = [1, 1]} : vector<16x192xf32> to vector<16x8xf32>
    %15 = vector.shape_cast %14 : vector<16x8xf32> to vector<2x8x8xf32>
    %16 = vector.extract_strided_slice %7 {offsets = [0, 32], sizes = [16, 8], strides = [1, 1]} : vector<16x192xf32> to vector<16x8xf32>
    %17 = vector.shape_cast %16 : vector<16x8xf32> to vector<2x8x8xf32>
    %18 = vector.extract_strided_slice %7 {offsets = [0, 40], sizes = [16, 8], strides = [1, 1]} : vector<16x192xf32> to vector<16x8xf32>
    %19 = vector.shape_cast %18 : vector<16x8xf32> to vector<2x8x8xf32>
    %20 = vector.extract_strided_slice %7 {offsets = [0, 48], sizes = [16, 8], strides = [1, 1]} : vector<16x192xf32> to vector<16x8xf32>
    %21 = vector.shape_cast %20 : vector<16x8xf32> to vector<2x8x8xf32>
    %22 = vector.extract_strided_slice %7 {offsets = [0, 56], sizes = [16, 8], strides = [1, 1]} : vector<16x192xf32> to vector<16x8xf32>
    %23 = vector.shape_cast %22 : vector<16x8xf32> to vector<2x8x8xf32>
    %24 = tpu.concatenate %9, %11, %13, %15, %17, %19, %21, %23 in 0 : vector<2x8x8xf32>, vector<2x8x8xf32>, vector<2x8x8xf32>, vector<2x8x8xf32>, vector<2x8x8xf32>, vector<2x8x8xf32>, vector<2x8x8xf32>, vector<2x8x8xf32> -> vector<16x8x8xf32>
    %25 = arith.truncf %24 : vector<16x8x8xf32> to vector<16x8x8xbf16>
    %26 = vector.extract_strided_slice %7 {offsets = [0, 64], sizes = [16, 8], strides = [1, 1]} : vector<16x192xf32> to vector<16x8xf32>
    %27 = vector.shape_cast %26 : vector<16x8xf32> to vector<2x8x8xf32>
    %28 = vector.extract_strided_slice %7 {offsets = [0, 72], sizes = [16, 8], strides = [1, 1]} : vector<16x192xf32> to vector<16x8xf32>
    %29 = vector.shape_cast %28 : vector<16x8xf32> to vector<2x8x8xf32>
    %30 = vector.extract_strided_slice %7 {offsets = [0, 80], sizes = [16, 8], strides = [1, 1]} : vector<16x192xf32> to vector<16x8xf32>
    %31 = vector.shape_cast %30 : vector<16x8xf32> to vector<2x8x8xf32>
    %32 = vector.extract_strided_slice %7 {offsets = [0, 88], sizes = [16, 8], strides = [1, 1]} : vector<16x192xf32> to vector<16x8xf32>
    %33 = vector.shape_cast %32 : vector<16x8xf32> to vector<2x8x8xf32>
    %34 = vector.extract_strided_slice %7 {offsets = [0, 96], sizes = [16, 8], strides = [1, 1]} : vector<16x192xf32> to vector<16x8xf32>
    %35 = vector.shape_cast %34 : vector<16x8xf32> to vector<2x8x8xf32>
    %36 = vector.extract_strided_slice %7 {offsets = [0, 104], sizes = [16, 8], strides = [1, 1]} : vector<16x192xf32> to vector<16x8xf32>
    %37 = vector.shape_cast %36 : vector<16x8xf32> to vector<2x8x8xf32>
    %38 = vector.extract_strided_slice %7 {offsets = [0, 112], sizes = [16, 8], strides = [1, 1]} : vector<16x192xf32> to vector<16x8xf32>
    %39 = vector.shape_cast %38 : vector<16x8xf32> to vector<2x8x8xf32>
    %40 = vector.extract_strided_slice %7 {offsets = [0, 120], sizes = [16, 8], strides = [1, 1]} : vector<16x192xf32> to vector<16x8xf32>
    %41 = vector.shape_cast %40 : vector<16x8xf32> to vector<2x8x8xf32>
    %42 = tpu.concatenate %27, %29, %31, %33, %35, %37, %39, %41 in 0 : vector<2x8x8xf32>, vector<2x8x8xf32>, vector<2x8x8xf32>, vector<2x8x8xf32>, vector<2x8x8xf32>, vector<2x8x8xf32>, vector<2x8x8xf32>, vector<2x8x8xf32> -> vector<16x8x8xf32>
    %43 = arith.truncf %42 : vector<16x8x8xf32> to vector<16x8x8xbf16>
    %44 = vector.extract_strided_slice %7 {offsets = [0, 128], sizes = [16, 8], strides = [1, 1]} : vector<16x192xf32> to vector<16x8xf32>
    %45 = vector.shape_cast %44 : vector<16x8xf32> to vector<2x8x8xf32>
    %46 = vector.extract_strided_slice %7 {offsets = [0, 136], sizes = [16, 8], strides = [1, 1]} : vector<16x192xf32> to vector<16x8xf32>
    %47 = vector.shape_cast %46 : vector<16x8xf32> to vector<2x8x8xf32>
    %48 = vector.extract_strided_slice %7 {offsets = [0, 144], sizes = [16, 8], strides = [1, 1]} : vector<16x192xf32> to vector<16x8xf32>
    %49 = vector.shape_cast %48 : vector<16x8xf32> to vector<2x8x8xf32>
    %50 = vector.extract_strided_slice %7 {offsets = [0, 152], sizes = [16, 8], strides = [1, 1]} : vector<16x192xf32> to vector<16x8xf32>
    %51 = vector.shape_cast %50 : vector<16x8xf32> to vector<2x8x8xf32>
    %52 = vector.extract_strided_slice %7 {offsets = [0, 160], sizes = [16, 8], strides = [1, 1]} : vector<16x192xf32> to vector<16x8xf32>
    %53 = vector.shape_cast %52 : vector<16x8xf32> to vector<2x8x8xf32>
    %54 = vector.extract_strided_slice %7 {offsets = [0, 168], sizes = [16, 8], strides = [1, 1]} : vector<16x192xf32> to vector<16x8xf32>
    %55 = vector.shape_cast %54 : vector<16x8xf32> to vector<2x8x8xf32>
    %56 = vector.extract_strided_slice %7 {offsets = [0, 176], sizes = [16, 8], strides = [1, 1]} : vector<16x192xf32> to vector<16x8xf32>
    %57 = vector.shape_cast %56 : vector<16x8xf32> to vector<2x8x8xf32>
    %58 = vector.extract_strided_slice %7 {offsets = [0, 184], sizes = [16, 8], strides = [1, 1]} : vector<16x192xf32> to vector<16x8xf32>
    %59 = vector.shape_cast %58 : vector<16x8xf32> to vector<2x8x8xf32>
    %60 = tpu.concatenate %45, %47, %49, %51, %53, %55, %57, %59 in 0 : vector<2x8x8xf32>, vector<2x8x8xf32>, vector<2x8x8xf32>, vector<2x8x8xf32>, vector<2x8x8xf32>, vector<2x8x8xf32>, vector<2x8x8xf32>, vector<2x8x8xf32> -> vector<16x8x8xf32>
    %61 = arith.truncf %60 : vector<16x8x8xf32> to vector<16x8x8xbf16>
    "tpu.trace_start"() <{level = 10 : i32, message = "bqd,bkd->bqk"}> : () -> ()
    %cst_6 = arith.constant dense<0.000000e+00> : vector<16x8x8xf32>
    %62 = tpu.matmul %25, %43, %cst_6 {dimension_numbers = #tpu.dot_dimension_numbers<[2], [2], [1], [1], [0, 0, 0, 1, 1, 1], [0], [0]>} : vector<16x8x8xbf16>, vector<16x8x8xbf16>, vector<16x8x8xf32> -> vector<16x8x8xf32>
    "tpu.trace_stop"() : () -> ()
    %cst_7 = arith.constant dense<0xFF800000> : vector<16x8xf32>
    %63 = vector.multi_reduction <maximumf>, %62, %cst_7 [2] : vector<16x8x8xf32> to vector<16x8xf32>
    %64 = vector.shape_cast %63 : vector<16x8xf32> to vector<16x8x1xf32>
    %65 = vector.broadcast %64 : vector<16x8x1xf32> to vector<16x8x8xf32>
    %66 = arith.subf %62, %65 : vector<16x8x8xf32>
    %67 = math.exp %66 : vector<16x8x8xf32>
    %cst_8 = arith.constant dense<0.000000e+00> : vector<16x8xf32>
    %68 = vector.multi_reduction <add>, %67, %cst_8 [2] : vector<16x8x8xf32> to vector<16x8xf32>
    %69 = vector.shape_cast %68 : vector<16x8xf32> to vector<16x8x1xf32>
    %70 = tpu.reciprocal %69 {approx = true} : vector<16x8x1xf32> -> vector<16x8x1xf32>
    %71 = vector.broadcast %70 : vector<16x8x1xf32> to vector<16x8x8xf32>
    %72 = arith.mulf %67, %71 : vector<16x8x8xf32>
    %73 = arith.truncf %72 : vector<16x8x8xf32> to vector<16x8x8xbf16>
    "tpu.trace_start"() <{level = 10 : i32, message = "bqk,bkd->bqd"}> : () -> ()
    %cst_9 = arith.constant dense<0.000000e+00> : vector<16x8x8xf32>
    %74 = tpu.matmul %73, %61, %cst_9 {dimension_numbers = #tpu.dot_dimension_numbers<[2], [1], [1], [2], [0, 0, 0, 1, 1, 2], [0], [0]>} : vector<16x8x8xbf16>, vector<16x8x8xbf16>, vector<16x8x8xf32> -> vector<16x8x8xf32>
    "tpu.trace_stop"() : () -> ()
    %75 = vector.extract_strided_slice %74 {offsets = [0, 0, 0], sizes = [2, 8, 8], strides = [1, 1, 1]} : vector<16x8x8xf32> to vector<2x8x8xf32>
    %76 = vector.shape_cast %75 : vector<2x8x8xf32> to vector<16x8xf32>
    %77 = vector.extract_strided_slice %74 {offsets = [2, 0, 0], sizes = [2, 8, 8], strides = [1, 1, 1]} : vector<16x8x8xf32> to vector<2x8x8xf32>
    %78 = vector.shape_cast %77 : vector<2x8x8xf32> to vector<16x8xf32>
    %79 = vector.extract_strided_slice %74 {offsets = [4, 0, 0], sizes = [2, 8, 8], strides = [1, 1, 1]} : vector<16x8x8xf32> to vector<2x8x8xf32>
    %80 = vector.shape_cast %79 : vector<2x8x8xf32> to vector<16x8xf32>
    %81 = vector.extract_strided_slice %74 {offsets = [6, 0, 0], sizes = [2, 8, 8], strides = [1, 1, 1]} : vector<16x8x8xf32> to vector<2x8x8xf32>
    %82 = vector.shape_cast %81 : vector<2x8x8xf32> to vector<16x8xf32>
    %83 = vector.extract_strided_slice %74 {offsets = [8, 0, 0], sizes = [2, 8, 8], strides = [1, 1, 1]} : vector<16x8x8xf32> to vector<2x8x8xf32>
    %84 = vector.shape_cast %83 : vector<2x8x8xf32> to vector<16x8xf32>
    %85 = vector.extract_strided_slice %74 {offsets = [10, 0, 0], sizes = [2, 8, 8], strides = [1, 1, 1]} : vector<16x8x8xf32> to vector<2x8x8xf32>
    %86 = vector.shape_cast %85 : vector<2x8x8xf32> to vector<16x8xf32>
    %87 = vector.extract_strided_slice %74 {offsets = [12, 0, 0], sizes = [2, 8, 8], strides = [1, 1, 1]} : vector<16x8x8xf32> to vector<2x8x8xf32>
    %88 = vector.shape_cast %87 : vector<2x8x8xf32> to vector<16x8xf32>
    %89 = vector.extract_strided_slice %74 {offsets = [14, 0, 0], sizes = [2, 8, 8], strides = [1, 1, 1]} : vector<16x8x8xf32> to vector<2x8x8xf32>
    %90 = vector.shape_cast %89 : vector<2x8x8xf32> to vector<16x8xf32>
    %91 = tpu.concatenate %76, %78, %80, %82, %84, %86, %88, %90 in 1 : vector<16x8xf32>, vector<16x8xf32>, vector<16x8xf32>, vector<16x8xf32>, vector<16x8xf32>, vector<16x8xf32>, vector<16x8xf32>, vector<16x8xf32> -> vector<16x64xf32>
    %92 = arith.truncf %91 : vector<16x64xf32> to vector<16x64xbf16>
    %c0_10 = arith.constant 0 : index
    %c0_11 = arith.constant 0 : index
    %93 = vector.load %arg4[%c0_10, %c0_11] : memref<64x64xbf16, #tpu.memory_space<vmem>>, vector<64x64xbf16>
    %cst_12 = arith.constant dense<0.000000e+00> : vector<16x64xf32>
    %94 = tpu.matmul %92, %93, %cst_12 {dimension_numbers = #tpu.dot_dimension_numbers<[1], [0], [0], [1], [0, 0, 1, 1], [], []>} : vector<16x64xbf16>, vector<64x64xbf16>, vector<16x64xf32> -> vector<16x64xf32>
    %c0_13 = arith.constant 0 : index
    %c0_14 = arith.constant 0 : index
    %95 = vector.load %arg5[%c0_13, %c0_14] : memref<1x64xf32, #tpu.memory_space<vmem>>, vector<1x64xf32>
    %96 = vector.broadcast %95 : vector<1x64xf32> to vector<16x64xf32>
    %97 = arith.addf %94, %96 : vector<16x64xf32>
    %98 = vector.shape_cast %97 : vector<16x64xf32> to vector<2x8x64xf32>
    %c0_15 = arith.constant 0 : index
    %c0_16 = arith.constant 0 : index
    %c0_17 = arith.constant 0 : index
    %99 = vector.load %arg6[%c0_15, %c0_16, %c0_17] : memref<2x8x64xf32, #tpu.memory_space<vmem>>, vector<2x8x64xf32>
    tpu.vector_store %arg6[%c0_15, %c0_16, %c0_17], %98 {strides = array<i32>} : memref<2x8x64xf32, #tpu.memory_space<vmem>>, vector<2x8x64xf32>,
    return
  }
  func.func @transform_0(%arg0: i32) -> (i32, i32, i32) {
    %c0_i32 = arith.constant 0 : i32
    %c0_i32_0 = arith.constant 0 : i32
    %c0_i32_1 = arith.constant 0 : i32
    %c0_i32_2 = arith.constant 0 : i32
    return %c0_i32, %c0_i32_0, %c0_i32_1 : i32, i32, i32
  }
  func.func @transform_1(%arg0: i32) -> (i32, i32) {
    %c0_i32 = arith.constant 0 : i32
    %c0_i32_0 = arith.constant 0 : i32
    %c0_i32_1 = arith.constant 0 : i32
    return %c0_i32, %c0_i32_0 : i32, i32
  }
  func.func @transform_2(%arg0: i32) -> (i32, i32) {
    %c0_i32 = arith.constant 0 : i32
    %c0_i32_0 = arith.constant 0 : i32
    %c0_i32_1 = arith.constant 0 : i32
    return %c0_i32, %c0_i32_0 : i32, i32
  }
  func.func @transform_3(%arg0: i32) -> (i32, i32) {
    %c0_i32 = arith.constant 0 : i32
    %c0_i32_0 = arith.constant 0 : i32
    %c0_i32_1 = arith.constant 0 : i32
    return %c0_i32, %c0_i32_0 : i32, i32
  }
  func.func @transform_4(%arg0: i32) -> (i32, i32) {
    %c0_i32 = arith.constant 0 : i32
    %c0_i32_0 = arith.constant 0 : i32
    %c0_i32_1 = arith.constant 0 : i32
    return %c0_i32, %c0_i32_0 : i32, i32
  }
  func.func @transform_5(%arg0: i32) -> (i32, i32, i32) {
    %c0_i32 = arith.constant 0 : i32
    %c0_i32_0 = arith.constant 0 : i32
    %c0_i32_1 = arith.constant 0 : i32
    %c0_i32_2 = arith.constant 0 : i32
    return %c0_i32, %c0_i32_0, %c0_i32_1 : i32, i32, i32
  }
}

</mosaic_0001>

<llo_original>
// kernel: tpu_custom_call.1
$region0: #{tpu_custom_call.1}
  #allocation0 [shape = 'u32[]', space=smem, size = 0x4, offset = 0x4, fixed_abs, tag = 'smem constant byte address 0x4 - core index']
  #allocation1 [shape = 'u32[144,128]{1,0:T(1,128)}', space=vmem, size = 0x12000, scoped, tag = 'internal scratch']
  %s0 = inlined_call_operand.hbm [shape: f32[2,8,64], index: 0, kind: input, shape index: {}]
  %s1 = inlined_call_operand.hbm [shape: bf16[64,192], index: 1, kind: input, shape index: {}]
  %s2 = inlined_call_operand.vmem [shape: f32[1,192], index: 2, kind: input, shape index: {}]
  %s3 = inlined_call_operand.hbm [shape: bf16[64,64], index: 3, kind: input, shape index: {}]
  %s4 = inlined_call_operand.vmem [shape: f32[1,64], index: 4, kind: input, shape index: {}]
  %s5 = inlined_call_operand.hbm [shape: f32[2,8,64], index: 5, kind: output, shape index: {}]
  %s6 = sld [smem:[#allocation0]]
  $region42: #{tpu_custom_call.1} parent=0
    _
  %s8 = ssub.s32 1, %s6
  %s9 = scalar_select 0, %s8, %s6
  $region1: #{tpu_custom_call.1} parent=0
    #allocation2 [shape = 'u8[8192]{0}', space=vmem, size = 0x2000, scoped, tag = 'input window, operand 0, single buffered']
    #allocation3 [shape = 's32[1]{0}', space=sflag, size = 0x4, scoped, tag = 'scoped memory for tpu_custom_call.1']
    #allocation4 [shape = 's32[1]{0}', space=sflag, size = 0x4, scoped, tag = 'scoped memory for tpu_custom_call.1']
    #allocation5 [shape = 'u8[32768]{0}', space=vmem, size = 0x8000, scoped, tag = 'input window, operand 1, single buffered']
    #allocation6 [shape = 's32[1]{0}', space=sflag, size = 0x4, scoped, tag = 'scoped memory for tpu_custom_call.1']
    #allocation7 [shape = 'u8[16384]{0}', space=vmem, size = 0x4000, scoped, tag = 'input window, operand 3, single buffered']
    #allocation8 [shape = 'u8[8192]{0}', space=vmem, size = 0x2000, scoped, tag = 'output window, operand 0, single buffered']
    %10 = vsyncpa [#allocation3], 0
    %11 = vsyncpa [#allocation6], 0
    %12 = vsyncpa [#allocation4], 0
    // Predicated region
    $region2: #{tpu_custom_call.1} parent=1 // pred_check
      _
    $region3: #{tpu_custom_call.1} parent=1 // pred_check_branch
      %14 = sbr.rel (0) target = $region5
    $region4: #{tpu_custom_call.1} parent=1 // pred_region
      %s16 = ssub.s32 256, 256
      %17 = vsyncadd [#allocation3], %s16
      %s18 = sshll.u32 [#allocation2], 4
      %s19 = int_to_ptr.vmem [resolvable:$true] %s18
      %24 = dma.hbm_to_vmem [thread:$0]  %s0, 256, %s19, [#allocation3], 128, 128, 8
    $region5: #{tpu_custom_call.1} parent=1 // pred_fallthru
      _
    // Predicated region
    $region6: #{tpu_custom_call.1} parent=1 // pred_check
      _
    $region7: #{tpu_custom_call.1} parent=1 // pred_check_branch
      %26 = sbr.rel (0) target = $region9
    $region8: #{tpu_custom_call.1} parent=1 // pred_region
      %s28 = ssub.s32 1024, 1024
      %29 = vsyncadd [#allocation6], %s28
      %s30 = sshll.u32 [#allocation5], 4
      %s31 = int_to_ptr.vmem [resolvable:$true] %s30
      %36 = dma.hbm_to_vmem [thread:$0]  %s1, 1024, %s31, [#allocation6], 128, 128, 8
    $region9: #{tpu_custom_call.1} parent=1 // pred_fallthru
      _
    // Predicated region
    $region10: #{tpu_custom_call.1} parent=1 // pred_check
      _
    $region11: #{tpu_custom_call.1} parent=1 // pred_check_branch
      %38 = sbr.rel (0) target = $region13
    $region12: #{tpu_custom_call.1} parent=1 // pred_region
      _
    $region13: #{tpu_custom_call.1} parent=1 // pred_fallthru
      _
    // Predicated region
    $region14: #{tpu_custom_call.1} parent=1 // pred_check
      _
    $region15: #{tpu_custom_call.1} parent=1 // pred_check_branch
      %40 = sbr.rel (0) target = $region17
    $region16: #{tpu_custom_call.1} parent=1 // pred_region
      %s42 = ssub.s32 512, 512
      %43 = vsyncadd [#allocation6], %s42
      %s44 = sshll.u32 [#allocation7], 4
      %s45 = int_to_ptr.vmem [resolvable:$true] %s44
      %50 = dma.hbm_to_vmem [thread:$0]  %s3, 512, %s45, [#allocation6], 64, 64, 4
    $region17: #{tpu_custom_call.1} parent=1 // pred_fallthru
      _
    // Predicated region
    $region18: #{tpu_custom_call.1} parent=1 // pred_check
      _
    $region19: #{tpu_custom_call.1} parent=1 // pred_check_branch
      %52 = sbr.rel (0) target = $region21
    $region20: #{tpu_custom_call.1} parent=1 // pred_region
      _
    $region21: #{tpu_custom_call.1} parent=1 // pred_fallthru
      _
    // Predicated region
    $region22: #{tpu_custom_call.1} parent=1 // pred_check
      _
    $region23: #{tpu_custom_call.1} parent=1 // pred_check_branch
      %54 = sbr.rel (0) target = $region25
    $region24: #{tpu_custom_call.1} parent=1 // pred_region
      %55 = dma.done [#allocation3], 256
    $region25: #{tpu_custom_call.1} parent=1 // pred_fallthru
      _
    // Predicated region
    $region26: #{tpu_custom_call.1} parent=1 // pred_check
      _
    $region27: #{tpu_custom_call.1} parent=1 // pred_check_branch
      %57 = sbr.rel (0) target = $region29
    $region28: #{tpu_custom_call.1} parent=1 // pred_region
      %58 = dma.done [#allocation6], 1024
    $region29: #{tpu_custom_call.1} parent=1 // pred_fallthru
      _
    // Predicated region
    $region30: #{tpu_custom_call.1} parent=1 // pred_check
      _
    $region31: #{tpu_custom_call.1} parent=1 // pred_check_branch
      %60 = sbr.rel (0) target = $region33
    $region32: #{tpu_custom_call.1} parent=1 // pred_region
      %61 = dma.done [#allocation6], 512
    $region33: #{tpu_custom_call.1} parent=1 // pred_fallthru
      _
    %v63 = vld [vmem:[#allocation2] sm:$0xff]
    %v64 = vld [vmem:[#allocation2 + $0x8] sm:$0xff]
    %v65 = vpack.c.bf16 %v64, %v63
    %v66 = vld [vmem:[#allocation5] sm:$0xff]
    %v67 = vld [vmem:[#allocation5 + $0x8] sm:$0xff]
    %v68 = vld [vmem:[#allocation5 + $0x10] sm:$0xff]
    %v69 = vld [vmem:[#allocation5 + $0x18] sm:$0xff]
    %v70 = vld [vmem:[#allocation5 + $0x20] sm:$0xff]
    %v71 = vld [vmem:[#allocation5 + $0x28] sm:$0xff]
    %v72 = vld [vmem:[#allocation5 + $0x30] sm:$0xff]
    %v73 = vld [vmem:[#allocation5 + $0x38] sm:$0xff]
    %v74 = vld [vmem:[%s2] sm:$0x3]
    %v76 = vlaneseq
    %v77 = vshrl.u32 %v76, 7
    %v78 = vsub.s32 0, %v77
    %v79 = vrot.slane %v74, %v78
    %v80 = vlaneseq
    %v81 = vshrl.u32 %v80, 7
    %v82 = vsub.s32 1, %v81
    %v83 = vrot.slane %v74, %v82
    %v94 = vunpack.c.l.b16 %v66
    %v95 = vunpack.c.h.b16 %v66
    %v96 = vunpack.c.l.b16 %v67
    %v97 = vunpack.c.h.b16 %v67
    %v98 = vunpack.c.l.b16 %v68
    %v99 = vunpack.c.h.b16 %v68
    %v100 = vunpack.c.l.b16 %v69
    %v101 = vunpack.c.h.b16 %v69
    %v102 = vunpack.c.l.b16 %v70
    %v103 = vunpack.c.h.b16 %v70
    %v104 = vunpack.c.l.b16 %v71
    %v105 = vunpack.c.h.b16 %v71
    %v106 = vunpack.c.l.b16 %v72
    %v107 = vunpack.c.h.b16 %v72
    %v108 = vunpack.c.l.b16 %v73
    %v109 = vunpack.c.h.b16 %v73
    %v110 = vpack.c.b16 %v96, %v94
    %v111 = vpack.c.b16 %v97, %v95
    %v112 = vpack.c.b16 %v100, %v98
    %v113 = vpack.c.b16 %v101, %v99
    %v114 = vpack.c.b16 %v104, %v102
    %v115 = vpack.c.b16 %v105, %v103
    %v116 = vpack.c.b16 %v108, %v106
    %v117 = vpack.c.b16 %v109, %v107
    %vm126 = vcmask 523264
    %v128 = vsel %vm126, %v65, 0
    %130 = vmatprep.subr.bf16.mxu0 0
    %131 = vmatpush1.bf16.msra.mxu0 0
    %132 = vmatprep.subr.bf16.mxu0 0
    %133 = vmatpush1.bf16.msra.mxu0 0
    %134 = vmatprep.subr.bf16.mxu0 0
    %135 = vmatpush1.bf16.msra.mxu0 0
    %136 = vmatprep.subr.bf16.mxu0 0
    %137 = vmatpush1.bf16.msra.mxu0 0
    %138 = vmatprep.subr.bf16.mxu0 %v117
    %139 = vmatpush1.bf16.msra.mxu0 %v116
    %140 = vmatprep.subr.bf16.mxu0 %v115
    %141 = vmatpush1.bf16.msra.mxu0 %v114
    %142 = vmatprep.subr.bf16.mxu0 %v113
    %143 = vmatpush1.bf16.msra.mxu0 %v112
    %144 = vmatprep.subr.bf16.mxu0 %v111
    %145 = vmatpush1.bf16.msra.mxu0 %v110
    %146 = vmatprep.subr.bf16.mxu0 0
    %147 = vmatpush2.bf16.msra.mxu0 0
    %148 = vmatprep.subr.bf16.mxu0 0
    %149 = vmatpush2.bf16.msra.mxu0 0
    %150 = vmatprep.subr.bf16.mxu0 0
    %151 = vmatpush2.bf16.msra.mxu0 0
    %152 = vmatprep.subr.bf16.mxu0 0
    %153 = vmatpush2.bf16.msra.mxu0 0
    %154 = vmatprep.subr.bf16.mxu0 0
    %155 = vmatpush2.bf16.msra.mxu0 0
    %156 = vmatprep.subr.bf16.mxu0 0
    %157 = vmatpush2.bf16.msra.mxu0 0
    %158 = vmatprep.subr.bf16.mxu0 0
    %159 = vmatpush2.bf16.msra.mxu0 0
    %160 = vmatprep.subr.bf16.mxu0 0
    %161 = vmatpush2.bf16.msra.mxu0 0
    %162 = vmatprep.mubr.bf16.mxu0 0
    %163 = vmatmul.mubr.bf16.gmra.mxu0 %v128
    %v164 = vpop.f32.mrf.mxu0
    %v165 = vadd.f32 %v79, %v164
    %v166 = vpop.f32.mrf.mxu0
    %v167 = vadd.f32 %v83, %v166
    %v168 = vpop.f32.mrf.mxu0
    %v169 = vadd.f32 %v79, %v168
    %v170 = vpop.f32.mrf.mxu0
    %v171 = vadd.f32 %v83, %v170
    %172 = vdwg.mxu0
    %175 = vrot.lane.b32.xlu0 %v165, 120
    %v176 = vpop.permute.xlu0 %175
    %177 = vrot.lane.b32.xlu0 %v169, 120
    %v178 = vpop.permute.xlu0 %177
    %181 = vrot.lane.b32.xlu0 %v165, 112
    %v182 = vpop.permute.xlu0 %181
    %183 = vrot.lane.b32.xlu0 %v169, 112
    %v184 = vpop.permute.xlu0 %183
    %187 = vrot.lane.b32.xlu0 %v165, 104
    %v188 = vpop.permute.xlu0 %187
    %189 = vrot.lane.b32.xlu0 %v169, 104
    %v190 = vpop.permute.xlu0 %189
    %193 = vrot.lane.b32.xlu0 %v165, 96
    %v194 = vpop.permute.xlu0 %193
    %195 = vrot.lane.b32.xlu0 %v169, 96
    %v196 = vpop.permute.xlu0 %195
    %199 = vrot.lane.b32.xlu0 %v165, 88
    %v200 = vpop.permute.xlu0 %199
    %201 = vrot.lane.b32.xlu0 %v169, 88
    %v202 = vpop.permute.xlu0 %201
    %205 = vrot.lane.b32.xlu0 %v165, 80
    %v206 = vpop.permute.xlu0 %205
    %207 = vrot.lane.b32.xlu0 %v169, 80
    %v208 = vpop.permute.xlu0 %207
    %211 = vrot.lane.b32.xlu0 %v165, 72
    %v212 = vpop.permute.xlu0 %211
    %213 = vrot.lane.b32.xlu0 %v169, 72
    %v214 = vpop.permute.xlu0 %213
    %v217 = vpack.c.bf16 %v165, %v165
    %v218 = vpack.c.bf16 %v169, %v169
    %v219 = vpack.c.bf16 %v176, %v176
    %v220 = vpack.c.bf16 %v178, %v178
    %v221 = vpack.c.bf16 %v182, %v182
    %v222 = vpack.c.bf16 %v184, %v184
    %v223 = vpack.c.bf16 %v188, %v188
    %v224 = vpack.c.bf16 %v190, %v190
    %v225 = vpack.c.bf16 %v194, %v194
    %v226 = vpack.c.bf16 %v196, %v196
    %v227 = vpack.c.bf16 %v200, %v200
    %v228 = vpack.c.bf16 %v202, %v202
    %v229 = vpack.c.bf16 %v206, %v206
    %v230 = vpack.c.bf16 %v208, %v208
    %v231 = vpack.c.bf16 %v212, %v212
    %v232 = vpack.c.bf16 %v214, %v214
    %235 = vrot.lane.b32.xlu0 %v167, 120
    %v236 = vpop.permute.xlu0 %235
    %237 = vrot.lane.b32.xlu0 %v171, 120
    %v238 = vpop.permute.xlu0 %237
    %241 = vrot.lane.b32.xlu0 %v167, 112
    %v242 = vpop.permute.xlu0 %241
    %243 = vrot.lane.b32.xlu0 %v171, 112
    %v244 = vpop.permute.xlu0 %243
    %247 = vrot.lane.b32.xlu0 %v167, 104
    %v248 = vpop.permute.xlu0 %247
    %249 = vrot.lane.b32.xlu0 %v171, 104
    %v250 = vpop.permute.xlu0 %249
    %253 = vrot.lane.b32.xlu0 %v167, 96
    %v254 = vpop.permute.xlu0 %253
    %255 = vrot.lane.b32.xlu0 %v171, 96
    %v256 = vpop.permute.xlu0 %255
    %259 = vrot.lane.b32.xlu0 %v167, 88
    %v260 = vpop.permute.xlu0 %259
    %261 = vrot.lane.b32.xlu0 %v171, 88
    %v262 = vpop.permute.xlu0 %261
    %265 = vrot.lane.b32.xlu0 %v167, 80
    %v266 = vpop.permute.xlu0 %265
    %267 = vrot.lane.b32.xlu0 %v171, 80
    %v268 = vpop.permute.xlu0 %267
    %271 = vrot.lane.b32.xlu0 %v167, 72
    %v272 = vpop.permute.xlu0 %271
    %273 = vrot.lane.b32.xlu0 %v171, 72
    %v274 = vpop.permute.xlu0 %273
    %v277 = vpack.c.bf16 %v167, %v167
    %v278 = vpack.c.bf16 %v171, %v171
    %v279 = vpack.c.bf16 %v236, %v236
    %v280 = vpack.c.bf16 %v238, %v238
    %v281 = vpack.c.bf16 %v242, %v242
    %v282 = vpack.c.bf16 %v244, %v244
    %v283 = vpack.c.bf16 %v248, %v248
    %v284 = vpack.c.bf16 %v250, %v250
    %v285 = vpack.c.bf16 %v254, %v254
    %v286 = vpack.c.bf16 %v256, %v256
    %v287 = vpack.c.bf16 %v260, %v260
    %v288 = vpack.c.bf16 %v262, %v262
    %v289 = vpack.c.bf16 %v266, %v266
    %v290 = vpack.c.bf16 %v268, %v268
    %v291 = vpack.c.bf16 %v272, %v272
    %v292 = vpack.c.bf16 %v274, %v274
    %294 = vrot.lane.b32.xlu0 %v217, 64
    %v295 = vpop.permute.xlu0 %294
    %vm296 = vcmask 64512
    %v298 = vsel %vm296, %v217, 0
    %v301 = vsel %vm296, %v295, 0
    %303 = vmatprep.subr.bf16.mxu0 0
    %304 = vmatpush1.bf16.xpose.msra.mxu0 0
    %305 = vmatprep.subr.bf16.mxu0 0
    %306 = vmatpush1.bf16.xpose.msra.mxu0 0
    %307 = vmatprep.subr.bf16.mxu0 0
    %308 = vmatpush1.bf16.xpose.msra.mxu0 0
    %309 = vmatprep.subr.bf16.mxu0 0
    %310 = vmatpush1.bf16.xpose.msra.mxu0 0
    %311 = vmatprep.subr.bf16.mxu0 0
    %312 = vmatpush1.bf16.xpose.msra.mxu0 0
    %313 = vmatprep.subr.bf16.mxu0 0
    %314 = vmatpush1.bf16.xpose.msra.mxu0 0
    %315 = vmatprep.subr.bf16.mxu0 0
    %316 = vmatpush1.bf16.xpose.msra.mxu0 0
    %317 = vmatprep.subr.bf16.mxu0 0
    %318 = vmatpush1.bf16.xpose.msra.mxu0 %v301
    %319 = vmatprep.subr.bf16.mxu0 0
    %320 = vmatpush2.bf16.xpose.msra.mxu0 0
    %321 = vmatprep.subr.bf16.mxu0 0
    %322 = vmatpush2.bf16.xpose.msra.mxu0 0
    %323 = vmatprep.subr.bf16.mxu0 0
    %324 = vmatpush2.bf16.xpose.msra.mxu0 0
    %325 = vmatprep.subr.bf16.mxu0 0
    %326 = vmatpush2.bf16.xpose.msra.mxu0 0
    %327 = vmatprep.subr.bf16.mxu0 0
    %328 = vmatpush2.bf16.xpose.msra.mxu0 0
    %329 = vmatprep.subr.bf16.mxu0 0
    %330 = vmatpush2.bf16.xpose.msra.mxu0 0
    %331 = vmatprep.subr.bf16.mxu0 0
    %332 = vmatpush2.bf16.xpose.msra.mxu0 0
    %333 = vmatprep.subr.bf16.mxu0 0
    %334 = vmatpush2.bf16.xpose.msra.mxu0 0
    %335 = vmatprep.mubr.bf16.mxu0 0
    %336 = vmatmul.mubr.bf16.gmra.mxu0 %v298
    %v337 = vpop.f32.mrf.mxu0
    %v338 = vadd.f32 0.0, %v337
    %v339 = vpop.f32.mrf.mxu0
    %v340 = vpop.f32.mrf.mxu0
    %v341 = vpop.f32.mrf.mxu0
    %342 = vdwg.mxu0
    %344 = vrot.lane.b32.xlu0 %v218, 64
    %v345 = vpop.permute.xlu0 %344
    %v347 = vsel %vm296, %v218, 0
    %v350 = vsel %vm296, %v345, 0
    %352 = vmatprep.subr.bf16.mxu0 0
    %353 = vmatpush1.bf16.xpose.msra.mxu0 0
    %354 = vmatprep.subr.bf16.mxu0 0
    %355 = vmatpush1.bf16.xpose.msra.mxu0 0
    %356 = vmatprep.subr.bf16.mxu0 0
    %357 = vmatpush1.bf16.xpose.msra.mxu0 0
    %358 = vmatprep.subr.bf16.mxu0 0
    %359 = vmatpush1.bf16.xpose.msra.mxu0 0
    %360 = vmatprep.subr.bf16.mxu0 0
    %361 = vmatpush1.bf16.xpose.msra.mxu0 0
    %362 = vmatprep.subr.bf16.mxu0 0
    %363 = vmatpush1.bf16.xpose.msra.mxu0 0
    %364 = vmatprep.subr.bf16.mxu0 0
    %365 = vmatpush1.bf16.xpose.msra.mxu0 0
    %366 = vmatprep.subr.bf16.mxu0 0
    %367 = vmatpush1.bf16.xpose.msra.mxu0 %v350
    %368 = vmatprep.subr.bf16.mxu0 0
    %369 = vmatpush2.bf16.xpose.msra.mxu0 0
    %370 = vmatprep.subr.bf16.mxu0 0
    %371 = vmatpush2.bf16.xpose.msra.mxu0 0
    %372 = vmatprep.subr.bf16.mxu0 0
    %373 = vmatpush2.bf16.xpose.msra.mxu0 0
    %374 = vmatprep.subr.bf16.mxu0 0
    %375 = vmatpush2.bf16.xpose.msra.mxu0 0
    %376 = vmatprep.subr.bf16.mxu0 0
    %377 = vmatpush2.bf16.xpose.msra.mxu0 0
    %378 = vmatprep.subr.bf16.mxu0 0
    %379 = vmatpush2.bf16.xpose.msra.mxu0 0
    %380 = vmatprep.subr.bf16.mxu0 0
    %381 = vmatpush2.bf16.xpose.msra.mxu0 0
    %382 = vmatprep.subr.bf16.mxu0 0
    %383 = vmatpush2.bf16.xpose.msra.mxu0 0
    %384 = vmatprep.mubr.bf16.mxu0 0
    %385 = vmatmul.mubr.bf16.gmra.mxu0 %v347
    %v386 = vpop.f32.mrf.mxu0
    %v387 = vadd.f32 0.0, %v386
    %v388 = vpop.f32.mrf.mxu0
    %v389 = vpop.f32.mrf.mxu0
    %v390 = vpop.f32.mrf.mxu0
    %391 = vdwg.mxu0
    %393 = vrot.lane.b32.xlu0 %v219, 64
    %v394 = vpop.permute.xlu0 %393
    %v396 = vsel %vm296, %v219, 0
    %v399 = vsel %vm296, %v394, 0
    %401 = vmatprep.subr.bf16.mxu0 0
    %402 = vmatpush1.bf16.xpose.msra.mxu0 0
    %403 = vmatprep.subr.bf16.mxu0 0
    %404 = vmatpush1.bf16.xpose.msra.mxu0 0
    %405 = vmatprep.subr.bf16.mxu0 0
    %406 = vmatpush1.bf16.xpose.msra.mxu0 0
    %407 = vmatprep.subr.bf16.mxu0 0
    %408 = vmatpush1.bf16.xpose.msra.mxu0 0
    %409 = vmatprep.subr.bf16.mxu0 0
    %410 = vmatpush1.bf16.xpose.msra.mxu0 0
    %411 = vmatprep.subr.bf16.mxu0 0
    %412 = vmatpush1.bf16.xpose.msra.mxu0 0
    %413 = vmatprep.subr.bf16.mxu0 0
    %414 = vmatpush1.bf16.xpose.msra.mxu0 0
    %415 = vmatprep.subr.bf16.mxu0 0
    %416 = vmatpush1.bf16.xpose.msra.mxu0 %v399
    %417 = vmatprep.subr.bf16.mxu0 0
    %418 = vmatpush2.bf16.xpose.msra.mxu0 0
    %419 = vmatprep.subr.bf16.mxu0 0
    %420 = vmatpush2.bf16.xpose.msra.mxu0 0
    %421 = vmatprep.subr.bf16.mxu0 0
    %422 = vmatpush2.bf16.xpose.msra.mxu0 0
    %423 = vmatprep.subr.bf16.mxu0 0
    %424 = vmatpush2.bf16.xpose.msra.mxu0 0
    %425 = vmatprep.subr.bf16.mxu0 0
    %426 = vmatpush2.bf16.xpose.msra.mxu0 0
    %427 = vmatprep.subr.bf16.mxu0 0
    %428 = vmatpush2.bf16.xpose.msra.mxu0 0
    %429 = vmatprep.subr.bf16.mxu0 0
    %430 = vmatpush2.bf16.xpose.msra.mxu0 0
    %431 = vmatprep.subr.bf16.mxu0 0
    %432 = vmatpush2.bf16.xpose.msra.mxu0 0
    %433 = vmatprep.mubr.bf16.mxu0 0
    %434 = vmatmul.mubr.bf16.gmra.mxu0 %v396
    %v435 = vpop.f32.mrf.mxu0
    %v436 = vadd.f32 0.0, %v435
    %v437 = vpop.f32.mrf.mxu0
    %v438 = vpop.f32.mrf.mxu0
    %v439 = vpop.f32.mrf.mxu0
    %440 = vdwg.mxu0
    %442 = vrot.lane.b32.xlu0 %v220, 64
    %v443 = vpop.permute.xlu0 %442
    %v445 = vsel %vm296, %v220, 0
    %v448 = vsel %vm296, %v443, 0
    %450 = vmatprep.subr.bf16.mxu0 0
    %451 = vmatpush1.bf16.xpose.msra.mxu0 0
    %452 = vmatprep.subr.bf16.mxu0 0
    %453 = vmatpush1.bf16.xpose.msra.mxu0 0
    %454 = vmatprep.subr.bf16.mxu0 0
    %455 = vmatpush1.bf16.xpose.msra.mxu0 0
    %456 = vmatprep.subr.bf16.mxu0 0
    %457 = vmatpush1.bf16.xpose.msra.mxu0 0
    %458 = vmatprep.subr.bf16.mxu0 0
    %459 = vmatpush1.bf16.xpose.msra.mxu0 0
    %460 = vmatprep.subr.bf16.mxu0 0
    %461 = vmatpush1.bf16.xpose.msra.mxu0 0
    %462 = vmatprep.subr.bf16.mxu0 0
    %463 = vmatpush1.bf16.xpose.msra.mxu0 0
    %464 = vmatprep.subr.bf16.mxu0 0
    %465 = vmatpush1.bf16.xpose.msra.mxu0 %v448
    %466 = vmatprep.subr.bf16.mxu0 0
    %467 = vmatpush2.bf16.xpose.msra.mxu0 0
    %468 = vmatprep.subr.bf16.mxu0 0
    %469 = vmatpush2.bf16.xpose.msra.mxu0 0
    %470 = vmatprep.subr.bf16.mxu0 0
    %471 = vmatpush2.bf16.xpose.msra.mxu0 0
    %472 = vmatprep.subr.bf16.mxu0 0
    %473 = vmatpush2.bf16.xpose.msra.mxu0 0
    %474 = vmatprep.subr.bf16.mxu0 0
    %475 = vmatpush2.bf16.xpose.msra.mxu0 0
    %476 = vmatprep.subr.bf16.mxu0 0
    %477 = vmatpush2.bf16.xpose.msra.mxu0 0
    %478 = vmatprep.subr.bf16.mxu0 0
    %479 = vmatpush2.bf16.xpose.msra.mxu0 0
    %480 = vmatprep.subr.bf16.mxu0 0
    %481 = vmatpush2.bf16.xpose.msra.mxu0 0
    %482 = vmatprep.mubr.bf16.mxu0 0
    %483 = vmatmul.mubr.bf16.gmra.mxu0 %v445
    %v484 = vpop.f32.mrf.mxu0
    %v485 = vadd.f32 0.0, %v484
    %v486 = vpop.f32.mrf.mxu0
    %v487 = vpop.f32.mrf.mxu0
    %v488 = vpop.f32.mrf.mxu0
    %489 = vdwg.mxu0
    %491 = vrot.lane.b32.xlu0 %v221, 64
    %v492 = vpop.permute.xlu0 %491
    %v494 = vsel %vm296, %v221, 0
    %v497 = vsel %vm296, %v492, 0
    %499 = vmatprep.subr.bf16.mxu0 0
    %500 = vmatpush1.bf16.xpose.msra.mxu0 0
    %501 = vmatprep.subr.bf16.mxu0 0
    %502 = vmatpush1.bf16.xpose.msra.mxu0 0
    %503 = vmatprep.subr.bf16.mxu0 0
    %504 = vmatpush1.bf16.xpose.msra.mxu0 0
    %505 = vmatprep.subr.bf16.mxu0 0
    %506 = vmatpush1.bf16.xpose.msra.mxu0 0
    %507 = vmatprep.subr.bf16.mxu0 0
    %508 = vmatpush1.bf16.xpose.msra.mxu0 0
    %509 = vmatprep.subr.bf16.mxu0 0
    %510 = vmatpush1.bf16.xpose.msra.mxu0 0
    %511 = vmatprep.subr.bf16.mxu0 0
    %512 = vmatpush1.bf16.xpose.msra.mxu0 0
    %513 = vmatprep.subr.bf16.mxu0 0
    %514 = vmatpush1.bf16.xpose.msra.mxu0 %v497
    %515 = vmatprep.subr.bf16.mxu0 0
    %516 = vmatpush2.bf16.xpose.msra.mxu0 0
    %517 = vmatprep.subr.bf16.mxu0 0
    %518 = vmatpush2.bf16.xpose.msra.mxu0 0
    %519 = vmatprep.subr.bf16.mxu0 0
    %520 = vmatpush2.bf16.xpose.msra.mxu0 0
    %521 = vmatprep.subr.bf16.mxu0 0
    %522 = vmatpush2.bf16.xpose.msra.mxu0 0
    %523 = vmatprep.subr.bf16.mxu0 0
    %524 = vmatpush2.bf16.xpose.msra.mxu0 0
    %525 = vmatprep.subr.bf16.mxu0 0
    %526 = vmatpush2.bf16.xpose.msra.mxu0 0
    %527 = vmatprep.subr.bf16.mxu0 0
    %528 = vmatpush2.bf16.xpose.msra.mxu0 0
    %529 = vmatprep.subr.bf16.mxu0 0
    %530 = vmatpush2.bf16.xpose.msra.mxu0 0
    %531 = vmatprep.mubr.bf16.mxu0 0
    %532 = vmatmul.mubr.bf16.gmra.mxu0 %v494
    %v533 = vpop.f32.mrf.mxu0
    %v534 = vadd.f32 0.0, %v533
    %v535 = vpop.f32.mrf.mxu0
    %v536 = vpop.f32.mrf.mxu0
    %v537 = vpop.f32.mrf.mxu0
    %538 = vdwg.mxu0
    %540 = vrot.lane.b32.xlu0 %v222, 64
    %v541 = vpop.permute.xlu0 %540
    %v543 = vsel %vm296, %v222, 0
    %v546 = vsel %vm296, %v541, 0
    %548 = vmatprep.subr.bf16.mxu0 0
    %549 = vmatpush1.bf16.xpose.msra.mxu0 0
    %550 = vmatprep.subr.bf16.mxu0 0
    %551 = vmatpush1.bf16.xpose.msra.mxu0 0
    %552 = vmatprep.subr.bf16.mxu0 0
    %553 = vmatpush1.bf16.xpose.msra.mxu0 0
    %554 = vmatprep.subr.bf16.mxu0 0
    %555 = vmatpush1.bf16.xpose.msra.mxu0 0
    %556 = vmatprep.subr.bf16.mxu0 0
    %557 = vmatpush1.bf16.xpose.msra.mxu0 0
    %558 = vmatprep.subr.bf16.mxu0 0
    %559 = vmatpush1.bf16.xpose.msra.mxu0 0
    %560 = vmatprep.subr.bf16.mxu0 0
    %561 = vmatpush1.bf16.xpose.msra.mxu0 0
    %562 = vmatprep.subr.bf16.mxu0 0
    %563 = vmatpush1.bf16.xpose.msra.mxu0 %v546
    %564 = vmatprep.subr.bf16.mxu0 0
    %565 = vmatpush2.bf16.xpose.msra.mxu0 0
    %566 = vmatprep.subr.bf16.mxu0 0
    %567 = vmatpush2.bf16.xpose.msra.mxu0 0
    %568 = vmatprep.subr.bf16.mxu0 0
    %569 = vmatpush2.bf16.xpose.msra.mxu0 0
    %570 = vmatprep.subr.bf16.mxu0 0
    %571 = vmatpush2.bf16.xpose.msra.mxu0 0
    %572 = vmatprep.subr.bf16.mxu0 0
    %573 = vmatpush2.bf16.xpose.msra.mxu0 0
    %574 = vmatprep.subr.bf16.mxu0 0
    %575 = vmatpush2.bf16.xpose.msra.mxu0 0
    %576 = vmatprep.subr.bf16.mxu0 0
    %577 = vmatpush2.bf16.xpose.msra.mxu0 0
    %578 = vmatprep.subr.bf16.mxu0 0
    %579 = vmatpush2.bf16.xpose.msra.mxu0 0
    %580 = vmatprep.mubr.bf16.mxu0 0
    %581 = vmatmul.mubr.bf16.gmra.mxu0 %v543
    %v582 = vpop.f32.mrf.mxu0
    %v583 = vadd.f32 0.0, %v582
    %v584 = vpop.f32.mrf.mxu0
    %v585 = vpop.f32.mrf.mxu0
    %v586 = vpop.f32.mrf.mxu0
    %587 = vdwg.mxu0
    %589 = vrot.lane.b32.xlu0 %v223, 64
    %v590 = vpop.permute.xlu0 %589
    %v592 = vsel %vm296, %v223, 0
    %v595 = vsel %vm296, %v590, 0
    %597 = vmatprep.subr.bf16.mxu0 0
    %598 = vmatpush1.bf16.xpose.msra.mxu0 0
    %599 = vmatprep.subr.bf16.mxu0 0
    %600 = vmatpush1.bf16.xpose.msra.mxu0 0
    %601 = vmatprep.subr.bf16.mxu0 0
    %602 = vmatpush1.bf16.xpose.msra.mxu0 0
    %603 = vmatprep.subr.bf16.mxu0 0
    %604 = vmatpush1.bf16.xpose.msra.mxu0 0
    %605 = vmatprep.subr.bf16.mxu0 0
    %606 = vmatpush1.bf16.xpose.msra.mxu0 0
    %607 = vmatprep.subr.bf16.mxu0 0
    %608 = vmatpush1.bf16.xpose.msra.mxu0 0
    %609 = vmatprep.subr.bf16.mxu0 0
    %610 = vmatpush1.bf16.xpose.msra.mxu0 0
    %611 = vmatprep.subr.bf16.mxu0 0
    %612 = vmatpush1.bf16.xpose.msra.mxu0 %v595
    %613 = vmatprep.subr.bf16.mxu0 0
    %614 = vmatpush2.bf16.xpose.msra.mxu0 0
    %615 = vmatprep.subr.bf16.mxu0 0
    %616 = vmatpush2.bf16.xpose.msra.mxu0 0
    %617 = vmatprep.subr.bf16.mxu0 0
    %618 = vmatpush2.bf16.xpose.msra.mxu0 0
    %619 = vmatprep.subr.bf16.mxu0 0
    %620 = vmatpush2.bf16.xpose.msra.mxu0 0
    %621 = vmatprep.subr.bf16.mxu0 0
    %622 = vmatpush2.bf16.xpose.msra.mxu0 0
    %623 = vmatprep.subr.bf16.mxu0 0
    %624 = vmatpush2.bf16.xpose.msra.mxu0 0
    %625 = vmatprep.subr.bf16.mxu0 0
    %626 = vmatpush2.bf16.xpose.msra.mxu0 0
    %627 = vmatprep.subr.bf16.mxu0 0
    %628 = vmatpush2.bf16.xpose.msra.mxu0 0
    %629 = vmatprep.mubr.bf16.mxu0 0
    %630 = vmatmul.mubr.bf16.gmra.mxu0 %v592
    %v631 = vpop.f32.mrf.mxu0
    %v632 = vadd.f32 0.0, %v631
    %v633 = vpop.f32.mrf.mxu0
    %v634 = vpop.f32.mrf.mxu0
    %v635 = vpop.f32.mrf.mxu0
    %636 = vdwg.mxu0
    %638 = vrot.lane.b32.xlu0 %v224, 64
    %v639 = vpop.permute.xlu0 %638
    %v641 = vsel %vm296, %v224, 0
    %v644 = vsel %vm296, %v639, 0
    %646 = vmatprep.subr.bf16.mxu0 0
    %647 = vmatpush1.bf16.xpose.msra.mxu0 0
    %648 = vmatprep.subr.bf16.mxu0 0
    %649 = vmatpush1.bf16.xpose.msra.mxu0 0
    %650 = vmatprep.subr.bf16.mxu0 0
    %651 = vmatpush1.bf16.xpose.msra.mxu0 0
    %652 = vmatprep.subr.bf16.mxu0 0
    %653 = vmatpush1.bf16.xpose.msra.mxu0 0
    %654 = vmatprep.subr.bf16.mxu0 0
    %655 = vmatpush1.bf16.xpose.msra.mxu0 0
    %656 = vmatprep.subr.bf16.mxu0 0
    %657 = vmatpush1.bf16.xpose.msra.mxu0 0
    %658 = vmatprep.subr.bf16.mxu0 0
    %659 = vmatpush1.bf16.xpose.msra.mxu0 0
    %660 = vmatprep.subr.bf16.mxu0 0
    %661 = vmatpush1.bf16.xpose.msra.mxu0 %v644
    %662 = vmatprep.subr.bf16.mxu0 0
    %663 = vmatpush2.bf16.xpose.msra.mxu0 0
    %664 = vmatprep.subr.bf16.mxu0 0
    %665 = vmatpush2.bf16.xpose.msra.mxu0 0
    %666 = vmatprep.subr.bf16.mxu0 0
    %667 = vmatpush2.bf16.xpose.msra.mxu0 0
    %668 = vmatprep.subr.bf16.mxu0 0
    %669 = vmatpush2.bf16.xpose.msra.mxu0 0
    %670 = vmatprep.subr.bf16.mxu0 0
    %671 = vmatpush2.bf16.xpose.msra.mxu0 0
    %672 = vmatprep.subr.bf16.mxu0 0
    %673 = vmatpush2.bf16.xpose.msra.mxu0 0
    %674 = vmatprep.subr.bf16.mxu0 0
    %675 = vmatpush2.bf16.xpose.msra.mxu0 0
    %676 = vmatprep.subr.bf16.mxu0 0
    %677 = vmatpush2.bf16.xpose.msra.mxu0 0
    %678 = vmatprep.mubr.bf16.mxu0 0
    %679 = vmatmul.mubr.bf16.gmra.mxu0 %v641
    %v680 = vpop.f32.mrf.mxu0
    %v681 = vadd.f32 0.0, %v680
    %v682 = vpop.f32.mrf.mxu0
    %v683 = vpop.f32.mrf.mxu0
    %v684 = vpop.f32.mrf.mxu0
    %685 = vdwg.mxu0
    %687 = vrot.lane.b32.xlu0 %v225, 64
    %v688 = vpop.permute.xlu0 %687
    %v690 = vsel %vm296, %v225, 0
    %v693 = vsel %vm296, %v688, 0
    %695 = vmatprep.subr.bf16.mxu0 0
    %696 = vmatpush1.bf16.xpose.msra.mxu0 0
    %697 = vmatprep.subr.bf16.mxu0 0
    %698 = vmatpush1.bf16.xpose.msra.mxu0 0
    %699 = vmatprep.subr.bf16.mxu0 0
    %700 = vmatpush1.bf16.xpose.msra.mxu0 0
    %701 = vmatprep.subr.bf16.mxu0 0
    %702 = vmatpush1.bf16.xpose.msra.mxu0 0
    %703 = vmatprep.subr.bf16.mxu0 0
    %704 = vmatpush1.bf16.xpose.msra.mxu0 0
    %705 = vmatprep.subr.bf16.mxu0 0
    %706 = vmatpush1.bf16.xpose.msra.mxu0 0
    %707 = vmatprep.subr.bf16.mxu0 0
    %708 = vmatpush1.bf16.xpose.msra.mxu0 0
    %709 = vmatprep.subr.bf16.mxu0 0
    %710 = vmatpush1.bf16.xpose.msra.mxu0 %v693
    %711 = vmatprep.subr.bf16.mxu0 0
    %712 = vmatpush2.bf16.xpose.msra.mxu0 0
    %713 = vmatprep.subr.bf16.mxu0 0
    %714 = vmatpush2.bf16.xpose.msra.mxu0 0
    %715 = vmatprep.subr.bf16.mxu0 0
    %716 = vmatpush2.bf16.xpose.msra.mxu0 0
    %717 = vmatprep.subr.bf16.mxu0 0
    %718 = vmatpush2.bf16.xpose.msra.mxu0 0
    %719 = vmatprep.subr.bf16.mxu0 0
    %720 = vmatpush2.bf16.xpose.msra.mxu0 0
    %721 = vmatprep.subr.bf16.mxu0 0
    %722 = vmatpush2.bf16.xpose.msra.mxu0 0
    %723 = vmatprep.subr.bf16.mxu0 0
    %724 = vmatpush2.bf16.xpose.msra.mxu0 0
    %725 = vmatprep.subr.bf16.mxu0 0
    %726 = vmatpush2.bf16.xpose.msra.mxu0 0
    %727 = vmatprep.mubr.bf16.mxu0 0
    %728 = vmatmul.mubr.bf16.gmra.mxu0 %v690
    %v729 = vpop.f32.mrf.mxu0
    %v730 = vadd.f32 0.0, %v729
    %v731 = vpop.f32.mrf.mxu0
    %v732 = vpop.f32.mrf.mxu0
    %v733 = vpop.f32.mrf.mxu0
    %734 = vdwg.mxu0
    %736 = vrot.lane.b32.xlu0 %v226, 64
    %v737 = vpop.permute.xlu0 %736
    %v739 = vsel %vm296, %v226, 0
    %v742 = vsel %vm296, %v737, 0
    %744 = vmatprep.subr.bf16.mxu0 0
    %745 = vmatpush1.bf16.xpose.msra.mxu0 0
    %746 = vmatprep.subr.bf16.mxu0 0
    %747 = vmatpush1.bf16.xpose.msra.mxu0 0
    %748 = vmatprep.subr.bf16.mxu0 0
    %749 = vmatpush1.bf16.xpose.msra.mxu0 0
    %750 = vmatprep.subr.bf16.mxu0 0
    %751 = vmatpush1.bf16.xpose.msra.mxu0 0
    %752 = vmatprep.subr.bf16.mxu0 0
    %753 = vmatpush1.bf16.xpose.msra.mxu0 0
    %754 = vmatprep.subr.bf16.mxu0 0
    %755 = vmatpush1.bf16.xpose.msra.mxu0 0
    %756 = vmatprep.subr.bf16.mxu0 0
    %757 = vmatpush1.bf16.xpose.msra.mxu0 0
    %758 = vmatprep.subr.bf16.mxu0 0
    %759 = vmatpush1.bf16.xpose.msra.mxu0 %v742
    %760 = vmatprep.subr.bf16.mxu0 0
    %761 = vmatpush2.bf16.xpose.msra.mxu0 0
    %762 = vmatprep.subr.bf16.mxu0 0
    %763 = vmatpush2.bf16.xpose.msra.mxu0 0
    %764 = vmatprep.subr.bf16.mxu0 0
    %765 = vmatpush2.bf16.xpose.msra.mxu0 0
    %766 = vmatprep.subr.bf16.mxu0 0
    %767 = vmatpush2.bf16.xpose.msra.mxu0 0
    %768 = vmatprep.subr.bf16.mxu0 0
    %769 = vmatpush2.bf16.xpose.msra.mxu0 0
    %770 = vmatprep.subr.bf16.mxu0 0
    %771 = vmatpush2.bf16.xpose.msra.mxu0 0
    %772 = vmatprep.subr.bf16.mxu0 0
    %773 = vmatpush2.bf16.xpose.msra.mxu0 0
    %774 = vmatprep.subr.bf16.mxu0 0
    %775 = vmatpush2.bf16.xpose.msra.mxu0 0
    %776 = vmatprep.mubr.bf16.mxu0 0
    %777 = vmatmul.mubr.bf16.gmra.mxu0 %v739
    %v778 = vpop.f32.mrf.mxu0
    %v779 = vadd.f32 0.0, %v778
    %v780 = vpop.f32.mrf.mxu0
    %v781 = vpop.f32.mrf.mxu0
    %v782 = vpop.f32.mrf.mxu0
    %783 = vdwg.mxu0
    %785 = vrot.lane.b32.xlu0 %v227, 64
    %v786 = vpop.permute.xlu0 %785
    %v788 = vsel %vm296, %v227, 0
    %v791 = vsel %vm296, %v786, 0
    %793 = vmatprep.subr.bf16.mxu0 0
    %794 = vmatpush1.bf16.xpose.msra.mxu0 0
    %795 = vmatprep.subr.bf16.mxu0 0
    %796 = vmatpush1.bf16.xpose.msra.mxu0 0
    %797 = vmatprep.subr.bf16.mxu0 0
    %798 = vmatpush1.bf16.xpose.msra.mxu0 0
    %799 = vmatprep.subr.bf16.mxu0 0
    %800 = vmatpush1.bf16.xpose.msra.mxu0 0
    %801 = vmatprep.subr.bf16.mxu0 0
    %802 = vmatpush1.bf16.xpose.msra.mxu0 0
    %803 = vmatprep.subr.bf16.mxu0 0
    %804 = vmatpush1.bf16.xpose.msra.mxu0 0
    %805 = vmatprep.subr.bf16.mxu0 0
    %806 = vmatpush1.bf16.xpose.msra.mxu0 0
    %807 = vmatprep.subr.bf16.mxu0 0
    %808 = vmatpush1.bf16.xpose.msra.mxu0 %v791
    %809 = vmatprep.subr.bf16.mxu0 0
    %810 = vmatpush2.bf16.xpose.msra.mxu0 0
    %811 = vmatprep.subr.bf16.mxu0 0
    %812 = vmatpush2.bf16.xpose.msra.mxu0 0
    %813 = vmatprep.subr.bf16.mxu0 0
    %814 = vmatpush2.bf16.xpose.msra.mxu0 0
    %815 = vmatprep.subr.bf16.mxu0 0
    %816 = vmatpush2.bf16.xpose.msra.mxu0 0
    %817 = vmatprep.subr.bf16.mxu0 0
    %818 = vmatpush2.bf16.xpose.msra.mxu0 0
    %819 = vmatprep.subr.bf16.mxu0 0
    %820 = vmatpush2.bf16.xpose.msra.mxu0 0
    %821 = vmatprep.subr.bf16.mxu0 0
    %822 = vmatpush2.bf16.xpose.msra.mxu0 0
    %823 = vmatprep.subr.bf16.mxu0 0
    %824 = vmatpush2.bf16.xpose.msra.mxu0 0
    %825 = vmatprep.mubr.bf16.mxu0 0
    %826 = vmatmul.mubr.bf16.gmra.mxu0 %v788
    %v827 = vpop.f32.mrf.mxu0
    %v828 = vadd.f32 0.0, %v827
    %v829 = vpop.f32.mrf.mxu0
    %v830 = vpop.f32.mrf.mxu0
    %v831 = vpop.f32.mrf.mxu0
    %832 = vdwg.mxu0
    %834 = vrot.lane.b32.xlu0 %v228, 64
    %v835 = vpop.permute.xlu0 %834
    %v837 = vsel %vm296, %v228, 0
    %v840 = vsel %vm296, %v835, 0
    %842 = vmatprep.subr.bf16.mxu0 0
    %843 = vmatpush1.bf16.xpose.msra.mxu0 0
    %844 = vmatprep.subr.bf16.mxu0 0
    %845 = vmatpush1.bf16.xpose.msra.mxu0 0
    %846 = vmatprep.subr.bf16.mxu0 0
    %847 = vmatpush1.bf16.xpose.msra.mxu0 0
    %848 = vmatprep.subr.bf16.mxu0 0
    %849 = vmatpush1.bf16.xpose.msra.mxu0 0
    %850 = vmatprep.subr.bf16.mxu0 0
    %851 = vmatpush1.bf16.xpose.msra.mxu0 0
    %852 = vmatprep.subr.bf16.mxu0 0
    %853 = vmatpush1.bf16.xpose.msra.mxu0 0
    %854 = vmatprep.subr.bf16.mxu0 0
    %855 = vmatpush1.bf16.xpose.msra.mxu0 0
    %856 = vmatprep.subr.bf16.mxu0 0
    %857 = vmatpush1.bf16.xpose.msra.mxu0 %v840
    %858 = vmatprep.subr.bf16.mxu0 0
    %859 = vmatpush2.bf16.xpose.msra.mxu0 0
    %860 = vmatprep.subr.bf16.mxu0 0
    %861 = vmatpush2.bf16.xpose.msra.mxu0 0
    %862 = vmatprep.subr.bf16.mxu0 0
    %863 = vmatpush2.bf16.xpose.msra.mxu0 0
    %864 = vmatprep.subr.bf16.mxu0 0
    %865 = vmatpush2.bf16.xpose.msra.mxu0 0
    %866 = vmatprep.subr.bf16.mxu0 0
    %867 = vmatpush2.bf16.xpose.msra.mxu0 0
    %868 = vmatprep.subr.bf16.mxu0 0
    %869 = vmatpush2.bf16.xpose.msra.mxu0 0
    %870 = vmatprep.subr.bf16.mxu0 0
    %871 = vmatpush2.bf16.xpose.msra.mxu0 0
    %872 = vmatprep.subr.bf16.mxu0 0
    %873 = vmatpush2.bf16.xpose.msra.mxu0 0
    %874 = vmatprep.mubr.bf16.mxu0 0
    %875 = vmatmul.mubr.bf16.gmra.mxu0 %v837
    %v876 = vpop.f32.mrf.mxu0
    %v877 = vadd.f32 0.0, %v876
    %v878 = vpop.f32.mrf.mxu0
    %v879 = vpop.f32.mrf.mxu0
    %v880 = vpop.f32.mrf.mxu0
    %881 = vdwg.mxu0
    %883 = vrot.lane.b32.xlu0 %v229, 64
    %v884 = vpop.permute.xlu0 %883
    %v886 = vsel %vm296, %v229, 0
    %v889 = vsel %vm296, %v884, 0
    %891 = vmatprep.subr.bf16.mxu0 0
    %892 = vmatpush1.bf16.xpose.msra.mxu0 0
    %893 = vmatprep.subr.bf16.mxu0 0
    %894 = vmatpush1.bf16.xpose.msra.mxu0 0
    %895 = vmatprep.subr.bf16.mxu0 0
    %896 = vmatpush1.bf16.xpose.msra.mxu0 0
    %897 = vmatprep.subr.bf16.mxu0 0
    %898 = vmatpush1.bf16.xpose.msra.mxu0 0
    %899 = vmatprep.subr.bf16.mxu0 0
    %900 = vmatpush1.bf16.xpose.msra.mxu0 0
    %901 = vmatprep.subr.bf16.mxu0 0
    %902 = vmatpush1.bf16.xpose.msra.mxu0 0
    %903 = vmatprep.subr.bf16.mxu0 0
    %904 = vmatpush1.bf16.xpose.msra.mxu0 0
    %905 = vmatprep.subr.bf16.mxu0 0
    %906 = vmatpush1.bf16.xpose.msra.mxu0 %v889
    %907 = vmatprep.subr.bf16.mxu0 0
    %908 = vmatpush2.bf16.xpose.msra.mxu0 0
    %909 = vmatprep.subr.bf16.mxu0 0
    %910 = vmatpush2.bf16.xpose.msra.mxu0 0
    %911 = vmatprep.subr.bf16.mxu0 0
    %912 = vmatpush2.bf16.xpose.msra.mxu0 0
    %913 = vmatprep.subr.bf16.mxu0 0
    %914 = vmatpush2.bf16.xpose.msra.mxu0 0
    %915 = vmatprep.subr.bf16.mxu0 0
    %916 = vmatpush2.bf16.xpose.msra.mxu0 0
    %917 = vmatprep.subr.bf16.mxu0 0
    %918 = vmatpush2.bf16.xpose.msra.mxu0 0
    %919 = vmatprep.subr.bf16.mxu0 0
    %920 = vmatpush2.bf16.xpose.msra.mxu0 0
    %921 = vmatprep.subr.bf16.mxu0 0
    %922 = vmatpush2.bf16.xpose.msra.mxu0 0
    %923 = vmatprep.mubr.bf16.mxu0 0
    %924 = vmatmul.mubr.bf16.gmra.mxu0 %v886
    %v925 = vpop.f32.mrf.mxu0
    %v926 = vadd.f32 0.0, %v925
    %v927 = vpop.f32.mrf.mxu0
    %v928 = vpop.f32.mrf.mxu0
    %v929 = vpop.f32.mrf.mxu0
    %930 = vdwg.mxu0
    %932 = vrot.lane.b32.xlu0 %v230, 64
    %v933 = vpop.permute.xlu0 %932
    %v935 = vsel %vm296, %v230, 0
    %v938 = vsel %vm296, %v933, 0
    %940 = vmatprep.subr.bf16.mxu0 0
    %941 = vmatpush1.bf16.xpose.msra.mxu0 0
    %942 = vmatprep.subr.bf16.mxu0 0
    %943 = vmatpush1.bf16.xpose.msra.mxu0 0
    %944 = vmatprep.subr.bf16.mxu0 0
    %945 = vmatpush1.bf16.xpose.msra.mxu0 0
    %946 = vmatprep.subr.bf16.mxu0 0
    %947 = vmatpush1.bf16.xpose.msra.mxu0 0
    %948 = vmatprep.subr.bf16.mxu0 0
    %949 = vmatpush1.bf16.xpose.msra.mxu0 0
    %950 = vmatprep.subr.bf16.mxu0 0
    %951 = vmatpush1.bf16.xpose.msra.mxu0 0
    %952 = vmatprep.subr.bf16.mxu0 0
    %953 = vmatpush1.bf16.xpose.msra.mxu0 0
    %954 = vmatprep.subr.bf16.mxu0 0
    %955 = vmatpush1.bf16.xpose.msra.mxu0 %v938
    %956 = vmatprep.subr.bf16.mxu0 0
    %957 = vmatpush2.bf16.xpose.msra.mxu0 0
    %958 = vmatprep.subr.bf16.mxu0 0
    %959 = vmatpush2.bf16.xpose.msra.mxu0 0
    %960 = vmatprep.subr.bf16.mxu0 0
    %961 = vmatpush2.bf16.xpose.msra.mxu0 0
    %962 = vmatprep.subr.bf16.mxu0 0
    %963 = vmatpush2.bf16.xpose.msra.mxu0 0
    %964 = vmatprep.subr.bf16.mxu0 0
    %965 = vmatpush2.bf16.xpose.msra.mxu0 0
    %966 = vmatprep.subr.bf16.mxu0 0
    %967 = vmatpush2.bf16.xpose.msra.mxu0 0
    %968 = vmatprep.subr.bf16.mxu0 0
    %969 = vmatpush2.bf16.xpose.msra.mxu0 0
    %970 = vmatprep.subr.bf16.mxu0 0
    %971 = vmatpush2.bf16.xpose.msra.mxu0 0
    %972 = vmatprep.mubr.bf16.mxu0 0
    %973 = vmatmul.mubr.bf16.gmra.mxu0 %v935
    %v974 = vpop.f32.mrf.mxu0
    %v975 = vadd.f32 0.0, %v974
    %v976 = vpop.f32.mrf.mxu0
    %v977 = vpop.f32.mrf.mxu0
    %v978 = vpop.f32.mrf.mxu0
    %979 = vdwg.mxu0
    %981 = vrot.lane.b32.xlu0 %v231, 64
    %v982 = vpop.permute.xlu0 %981
    %v984 = vsel %vm296, %v231, 0
    %v987 = vsel %vm296, %v982, 0
    %989 = vmatprep.subr.bf16.mxu0 0
    %990 = vmatpush1.bf16.xpose.msra.mxu0 0
    %991 = vmatprep.subr.bf16.mxu0 0
    %992 = vmatpush1.bf16.xpose.msra.mxu0 0
    %993 = vmatprep.subr.bf16.mxu0 0
    %994 = vmatpush1.bf16.xpose.msra.mxu0 0
    %995 = vmatprep.subr.bf16.mxu0 0
    %996 = vmatpush1.bf16.xpose.msra.mxu0 0
    %997 = vmatprep.subr.bf16.mxu0 0
    %998 = vmatpush1.bf16.xpose.msra.mxu0 0
    %999 = vmatprep.subr.bf16.mxu0 0
    %1000 = vmatpush1.bf16.xpose.msra.mxu0 0
    %1001 = vmatprep.subr.bf16.mxu0 0
    %1002 = vmatpush1.bf16.xpose.msra.mxu0 0
    %1003 = vmatprep.subr.bf16.mxu0 0
    %1004 = vmatpush1.bf16.xpose.msra.mxu0 %v987
    %1005 = vmatprep.subr.bf16.mxu0 0
    %1006 = vmatpush2.bf16.xpose.msra.mxu0 0
    %1007 = vmatprep.subr.bf16.mxu0 0
    %1008 = vmatpush2.bf16.xpose.msra.mxu0 0
    %1009 = vmatprep.subr.bf16.mxu0 0
    %1010 = vmatpush2.bf16.xpose.msra.mxu0 0
    %1011 = vmatprep.subr.bf16.mxu0 0
    %1012 = vmatpush2.bf16.xpose.msra.mxu0 0
    %1013 = vmatprep.subr.bf16.mxu0 0
    %1014 = vmatpush2.bf16.xpose.msra.mxu0 0
    %1015 = vmatprep.subr.bf16.mxu0 0
    %1016 = vmatpush2.bf16.xpose.msra.mxu0 0
    %1017 = vmatprep.subr.bf16.mxu0 0
    %1018 = vmatpush2.bf16.xpose.msra.mxu0 0
    %1019 = vmatprep.subr.bf16.mxu0 0
    %1020 = vmatpush2.bf16.xpose.msra.mxu0 0
    %1021 = vmatprep.mubr.bf16.mxu0 0
    %1022 = vmatmul.mubr.bf16.gmra.mxu0 %v984
    %v1023 = vpop.f32.mrf.mxu0
    %v1024 = vadd.f32 0.0, %v1023
    %v1025 = vpop.f32.mrf.mxu0
    %v1026 = vpop.f32.mrf.mxu0
    %v1027 = vpop.f32.mrf.mxu0
    %1028 = vdwg.mxu0
    %1030 = vrot.lane.b32.xlu0 %v232, 64
    %v1031 = vpop.permute.xlu0 %1030
    %v1033 = vsel %vm296, %v232, 0
    %v1036 = vsel %vm296, %v1031, 0
    %1038 = vmatprep.subr.bf16.mxu0 0
    %1039 = vmatpush1.bf16.xpose.msra.mxu0 0
    %1040 = vmatprep.subr.bf16.mxu0 0
    %1041 = vmatpush1.bf16.xpose.msra.mxu0 0
    %1042 = vmatprep.subr.bf16.mxu0 0
    %1043 = vmatpush1.bf16.xpose.msra.mxu0 0
    %1044 = vmatprep.subr.bf16.mxu0 0
    %1045 = vmatpush1.bf16.xpose.msra.mxu0 0
    %1046 = vmatprep.subr.bf16.mxu0 0
    %1047 = vmatpush1.bf16.xpose.msra.mxu0 0
    %1048 = vmatprep.subr.bf16.mxu0 0
    %1049 = vmatpush1.bf16.xpose.msra.mxu0 0
    %1050 = vmatprep.subr.bf16.mxu0 0
    %1051 = vmatpush1.bf16.xpose.msra.mxu0 0
    %1052 = vmatprep.subr.bf16.mxu0 0
    %1053 = vmatpush1.bf16.xpose.msra.mxu0 %v1036
    %1054 = vmatprep.subr.bf16.mxu0 0
    %1055 = vmatpush2.bf16.xpose.msra.mxu0 0
    %1056 = vmatprep.subr.bf16.mxu0 0
    %1057 = vmatpush2.bf16.xpose.msra.mxu0 0
    %1058 = vmatprep.subr.bf16.mxu0 0
    %1059 = vmatpush2.bf16.xpose.msra.mxu0 0
    %1060 = vmatprep.subr.bf16.mxu0 0
    %1061 = vmatpush2.bf16.xpose.msra.mxu0 0
    %1062 = vmatprep.subr.bf16.mxu0 0
    %1063 = vmatpush2.bf16.xpose.msra.mxu0 0
    %1064 = vmatprep.subr.bf16.mxu0 0
    %1065 = vmatpush2.bf16.xpose.msra.mxu0 0
    %1066 = vmatprep.subr.bf16.mxu0 0
    %1067 = vmatpush2.bf16.xpose.msra.mxu0 0
    %1068 = vmatprep.subr.bf16.mxu0 0
    %1069 = vmatpush2.bf16.xpose.msra.mxu0 0
    %1070 = vmatprep.mubr.bf16.mxu0 0
    %1071 = vmatmul.mubr.bf16.gmra.mxu0 %v1033
    %v1072 = vpop.f32.mrf.mxu0
    %v1073 = vadd.f32 0.0, %v1072
    %v1074 = vpop.f32.mrf.mxu0
    %v1075 = vpop.f32.mrf.mxu0
    %v1076 = vpop.f32.mrf.mxu0
    %1077 = vdwg.mxu0
    %v1078 = vsel %vm296, %v338, -inf
    %1079 = vmax.xlane.f32.xlu0 %v1078
    %v1080 = vpop.xlane.xlu0 %1079
    %v1081 = vsel %vm296, %v387, -inf
    %1082 = vmax.xlane.f32.xlu0 %v1081
    %v1083 = vpop.xlane.xlu0 %1082
    %v1084 = vsel %vm296, %v436, -inf
    %1085 = vmax.xlane.f32.xlu0 %v1084
    %v1086 = vpop.xlane.xlu0 %1085
    %v1087 = vsel %vm296, %v485, -inf
    %1088 = vmax.xlane.f32.xlu0 %v1087
    %v1089 = vpop.xlane.xlu0 %1088
    %v1090 = vsel %vm296, %v534, -inf
    %1091 = vmax.xlane.f32.xlu0 %v1090
    %v1092 = vpop.xlane.xlu0 %1091
    %v1093 = vsel %vm296, %v583, -inf
    %1094 = vmax.xlane.f32.xlu0 %v1093
    %v1095 = vpop.xlane.xlu0 %1094
    %v1096 = vsel %vm296, %v632, -inf
    %1097 = vmax.xlane.f32.xlu0 %v1096
    %v1098 = vpop.xlane.xlu0 %1097
    %v1099 = vsel %vm296, %v681, -inf
    %1100 = vmax.xlane.f32.xlu0 %v1099
    %v1101 = vpop.xlane.xlu0 %1100
    %v1102 = vsel %vm296, %v730, -inf
    %1103 = vmax.xlane.f32.xlu0 %v1102
    %v1104 = vpop.xlane.xlu0 %1103
    %v1105 = vsel %vm296, %v779, -inf
    %1106 = vmax.xlane.f32.xlu0 %v1105
    %v1107 = vpop.xlane.xlu0 %1106
    %v1108 = vsel %vm296, %v828, -inf
    %1109 = vmax.xlane.f32.xlu0 %v1108
    %v1110 = vpop.xlane.xlu0 %1109
    %v1111 = vsel %vm296, %v877, -inf
    %1112 = vmax.xlane.f32.xlu0 %v1111
    %v1113 = vpop.xlane.xlu0 %1112
    %v1114 = vsel %vm296, %v926, -inf
    %1115 = vmax.xlane.f32.xlu0 %v1114
    %v1116 = vpop.xlane.xlu0 %1115
    %v1117 = vsel %vm296, %v975, -inf
    %1118 = vmax.xlane.f32.xlu0 %v1117
    %v1119 = vpop.xlane.xlu0 %1118
    %v1120 = vsel %vm296, %v1024, -inf
    %1121 = vmax.xlane.f32.xlu0 %v1120
    %v1122 = vpop.xlane.xlu0 %1121
    %v1123 = vsel %vm296, %v1073, -inf
    %1124 = vmax.xlane.f32.xlu0 %v1123
    %v1125 = vpop.xlane.xlu0 %1124
    %v1126 = vsub.f32 %v338, %v1080
    %v1127 = vsub.f32 %v387, %v1083
    %v1128 = vsub.f32 %v436, %v1086
    %v1129 = vsub.f32 %v485, %v1089
    %v1130 = vsub.f32 %v534, %v1092
    %v1131 = vsub.f32 %v583, %v1095
    %v1132 = vsub.f32 %v632, %v1098
    %v1133 = vsub.f32 %v681, %v1101
    %v1134 = vsub.f32 %v730, %v1104
    %v1135 = vsub.f32 %v779, %v1107
    %v1136 = vsub.f32 %v828, %v1110
    %v1137 = vsub.f32 %v877, %v1113
    %v1138 = vsub.f32 %v926, %v1116
    %v1139 = vsub.f32 %v975, %v1119
    %v1140 = vsub.f32 %v1024, %v1122
    %v1141 = vsub.f32 %v1073, %v1125
    %v1142 = vmul.f32 %v1126, 1.442695
    %v1143 = vpow.pop %v1142
    %v1144 = vmul.f32 %v1127, 1.442695
    %v1145 = vpow.pop %v1144
    %v1146 = vmul.f32 %v1128, 1.442695
    %v1147 = vpow.pop %v1146
    %v1148 = vmul.f32 %v1129, 1.442695
    %v1149 = vpow.pop %v1148
    %v1150 = vmul.f32 %v1130, 1.442695
    %v1151 = vpow.pop %v1150
    %v1152 = vmul.f32 %v1131, 1.442695
    %v1153 = vpow.pop %v1152
    %v1154 = vmul.f32 %v1132, 1.442695
    %v1155 = vpow.pop %v1154
    %v1156 = vmul.f32 %v1133, 1.442695
    %v1157 = vpow.pop %v1156
    %v1158 = vmul.f32 %v1134, 1.442695
    %v1159 = vpow.pop %v1158
    %v1160 = vmul.f32 %v1135, 1.442695
    %v1161 = vpow.pop %v1160
    %v1162 = vmul.f32 %v1136, 1.442695
    %v1163 = vpow.pop %v1162
    %v1164 = vmul.f32 %v1137, 1.442695
    %v1165 = vpow.pop %v1164
    %v1166 = vmul.f32 %v1138, 1.442695
    %v1167 = vpow.pop %v1166
    %v1168 = vmul.f32 %v1139, 1.442695
    %v1169 = vpow.pop %v1168
    %v1170 = vmul.f32 %v1140, 1.442695
    %v1171 = vpow.pop %v1170
    %v1172 = vmul.f32 %v1141, 1.442695
    %v1173 = vpow.pop %v1172
    %v1174 = vsel %vm296, %v1143, 0.0
    %1175 = vadd.xlane.f32.xlu0 %v1174
    %v1176 = vpop.xlane.xlu0 %1175
    %v1177 = vsel %vm296, %v1145, 0.0
    %1178 = vadd.xlane.f32.xlu0 %v1177
    %v1179 = vpop.xlane.xlu0 %1178
    %v1180 = vsel %vm296, %v1147, 0.0
    %1181 = vadd.xlane.f32.xlu0 %v1180
    %v1182 = vpop.xlane.xlu0 %1181
    %v1183 = vsel %vm296, %v1149, 0.0
    %1184 = vadd.xlane.f32.xlu0 %v1183
    %v1185 = vpop.xlane.xlu0 %1184
    %v1186 = vsel %vm296, %v1151, 0.0
    %1187 = vadd.xlane.f32.xlu0 %v1186
    %v1188 = vpop.xlane.xlu0 %1187
    %v1189 = vsel %vm296, %v1153, 0.0
    %1190 = vadd.xlane.f32.xlu0 %v1189
    %v1191 = vpop.xlane.xlu0 %1190
    %v1192 = vsel %vm296, %v1155, 0.0
    %1193 = vadd.xlane.f32.xlu0 %v1192
    %v1194 = vpop.xlane.xlu0 %1193
    %v1195 = vsel %vm296, %v1157, 0.0
    %1196 = vadd.xlane.f32.xlu0 %v1195
    %v1197 = vpop.xlane.xlu0 %1196
    %v1198 = vsel %vm296, %v1159, 0.0
    %1199 = vadd.xlane.f32.xlu0 %v1198
    %v1200 = vpop.xlane.xlu0 %1199
    %v1201 = vsel %vm296, %v1161, 0.0
    %1202 = vadd.xlane.f32.xlu0 %v1201
    %v1203 = vpop.xlane.xlu0 %1202
    %v1204 = vsel %vm296, %v1163, 0.0
    %1205 = vadd.xlane.f32.xlu0 %v1204
    %v1206 = vpop.xlane.xlu0 %1205
    %v1207 = vsel %vm296, %v1165, 0.0
    %1208 = vadd.xlane.f32.xlu0 %v1207
    %v1209 = vpop.xlane.xlu0 %1208
    %v1210 = vsel %vm296, %v1167, 0.0
    %1211 = vadd.xlane.f32.xlu0 %v1210
    %v1212 = vpop.xlane.xlu0 %1211
    %v1213 = vsel %vm296, %v1169, 0.0
    %1214 = vadd.xlane.f32.xlu0 %v1213
    %v1215 = vpop.xlane.xlu0 %1214
    %v1216 = vsel %vm296, %v1171, 0.0
    %1217 = vadd.xlane.f32.xlu0 %v1216
    %v1218 = vpop.xlane.xlu0 %1217
    %v1219 = vsel %vm296, %v1173, 0.0
    %1220 = vadd.xlane.f32.xlu0 %v1219
    %v1221 = vpop.xlane.xlu0 %1220
    %v1222 = vrcp.pop %v1176
    %v1223 = vrcp.pop %v1179
    %v1224 = vrcp.pop %v1182
    %v1225 = vrcp.pop %v1185
    %v1226 = vrcp.pop %v1188
    %v1227 = vrcp.pop %v1191
    %v1228 = vrcp.pop %v1194
    %v1229 = vrcp.pop %v1197
    %v1230 = vrcp.pop %v1200
    %v1231 = vrcp.pop %v1203
    %v1232 = vrcp.pop %v1206
    %v1233 = vrcp.pop %v1209
    %v1234 = vrcp.pop %v1212
    %v1235 = vrcp.pop %v1215
    %v1236 = vrcp.pop %v1218
    %v1237 = vrcp.pop %v1221
    %v1238 = vmul.f32 %v1143, %v1222
    %v1239 = vmul.f32 %v1145, %v1223
    %v1240 = vmul.f32 %v1147, %v1224
    %v1241 = vmul.f32 %v1149, %v1225
    %v1242 = vmul.f32 %v1151, %v1226
    %v1243 = vmul.f32 %v1153, %v1227
    %v1244 = vmul.f32 %v1155, %v1228
    %v1245 = vmul.f32 %v1157, %v1229
    %v1246 = vmul.f32 %v1159, %v1230
    %v1247 = vmul.f32 %v1161, %v1231
    %v1248 = vmul.f32 %v1163, %v1232
    %v1249 = vmul.f32 %v1165, %v1233
    %v1250 = vmul.f32 %v1167, %v1234
    %v1251 = vmul.f32 %v1169, %v1235
    %v1252 = vmul.f32 %v1171, %v1236
    %v1253 = vmul.f32 %v1173, %v1237
    %v1254 = vpack.c.bf16 %v1238, %v1238
    %v1255 = vpack.c.bf16 %v1239, %v1239
    %v1256 = vpack.c.bf16 %v1240, %v1240
    %v1257 = vpack.c.bf16 %v1241, %v1241
    %v1258 = vpack.c.bf16 %v1242, %v1242
    %v1259 = vpack.c.bf16 %v1243, %v1243
    %v1260 = vpack.c.bf16 %v1244, %v1244
    %v1261 = vpack.c.bf16 %v1245, %v1245
    %v1262 = vpack.c.bf16 %v1246, %v1246
    %v1263 = vpack.c.bf16 %v1247, %v1247
    %v1264 = vpack.c.bf16 %v1248, %v1248
    %v1265 = vpack.c.bf16 %v1249, %v1249
    %v1266 = vpack.c.bf16 %v1250, %v1250
    %v1267 = vpack.c.bf16 %v1251, %v1251
    %v1268 = vpack.c.bf16 %v1252, %v1252
    %v1269 = vpack.c.bf16 %v1253, %v1253
    %v1271 = vsel %vm296, %v1254, 0
    %vm1273 = vcmask 1043456
    %v1275 = vsel %vm1273, %v277, 0
    %1277 = vmatprep.subr.bf16.mxu0 0
    %1278 = vmatpush1.bf16.msra.mxu0 0
    %1279 = vmatprep.subr.bf16.mxu0 0
    %1280 = vmatpush1.bf16.msra.mxu0 0
    %1281 = vmatprep.subr.bf16.mxu0 0
    %1282 = vmatpush1.bf16.msra.mxu0 0
    %1283 = vmatprep.subr.bf16.mxu0 0
    %1284 = vmatpush1.bf16.msra.mxu0 0
    %1285 = vmatprep.subr.bf16.mxu0 0
    %1286 = vmatpush1.bf16.msra.mxu0 0
    %1287 = vmatprep.subr.bf16.mxu0 0
    %1288 = vmatpush1.bf16.msra.mxu0 0
    %1289 = vmatprep.subr.bf16.mxu0 0
    %1290 = vmatpush1.bf16.msra.mxu0 0
    %1291 = vmatprep.subr.bf16.mxu0 0
    %1292 = vmatpush1.bf16.msra.mxu0 %v1275
    %1293 = vmatprep.subr.bf16.mxu0 0
    %1294 = vmatpush2.bf16.msra.mxu0 0
    %1295 = vmatprep.subr.bf16.mxu0 0
    %1296 = vmatpush2.bf16.msra.mxu0 0
    %1297 = vmatprep.subr.bf16.mxu0 0
    %1298 = vmatpush2.bf16.msra.mxu0 0
    %1299 = vmatprep.subr.bf16.mxu0 0
    %1300 = vmatpush2.bf16.msra.mxu0 0
    %1301 = vmatprep.subr.bf16.mxu0 0
    %1302 = vmatpush2.bf16.msra.mxu0 0
    %1303 = vmatprep.subr.bf16.mxu0 0
    %1304 = vmatpush2.bf16.msra.mxu0 0
    %1305 = vmatprep.subr.bf16.mxu0 0
    %1306 = vmatpush2.bf16.msra.mxu0 0
    %1307 = vmatprep.subr.bf16.mxu0 0
    %1308 = vmatpush2.bf16.msra.mxu0 0
    %1309 = vmatprep.mubr.bf16.mxu0 0
    %1310 = vmatmul.mubr.bf16.gmra.mxu0 %v1271
    %v1311 = vpop.f32.mrf.mxu0
    %v1312 = vadd.f32 0.0, %v1311
    %v1313 = vpop.f32.mrf.mxu0
    %v1314 = vpop.f32.mrf.mxu0
    %v1315 = vpop.f32.mrf.mxu0
    %1316 = vdwg.mxu0
    %v1318 = vsel %vm296, %v1255, 0
    %v1321 = vsel %vm1273, %v278, 0
    %1323 = vmatprep.subr.bf16.mxu0 0
    %1324 = vmatpush1.bf16.msra.mxu0 0
    %1325 = vmatprep.subr.bf16.mxu0 0
    %1326 = vmatpush1.bf16.msra.mxu0 0
    %1327 = vmatprep.subr.bf16.mxu0 0
    %1328 = vmatpush1.bf16.msra.mxu0 0
    %1329 = vmatprep.subr.bf16.mxu0 0
    %1330 = vmatpush1.bf16.msra.mxu0 0
    %1331 = vmatprep.subr.bf16.mxu0 0
    %1332 = vmatpush1.bf16.msra.mxu0 0
    %1333 = vmatprep.subr.bf16.mxu0 0
    %1334 = vmatpush1.bf16.msra.mxu0 0
    %1335 = vmatprep.subr.bf16.mxu0 0
    %1336 = vmatpush1.bf16.msra.mxu0 0
    %1337 = vmatprep.subr.bf16.mxu0 0
    %1338 = vmatpush1.bf16.msra.mxu0 %v1321
    %1339 = vmatprep.subr.bf16.mxu0 0
    %1340 = vmatpush2.bf16.msra.mxu0 0
    %1341 = vmatprep.subr.bf16.mxu0 0
    %1342 = vmatpush2.bf16.msra.mxu0 0
    %1343 = vmatprep.subr.bf16.mxu0 0
    %1344 = vmatpush2.bf16.msra.mxu0 0
    %1345 = vmatprep.subr.bf16.mxu0 0
    %1346 = vmatpush2.bf16.msra.mxu0 0
    %1347 = vmatprep.subr.bf16.mxu0 0
    %1348 = vmatpush2.bf16.msra.mxu0 0
    %1349 = vmatprep.subr.bf16.mxu0 0
    %1350 = vmatpush2.bf16.msra.mxu0 0
    %1351 = vmatprep.subr.bf16.mxu0 0
    %1352 = vmatpush2.bf16.msra.mxu0 0
    %1353 = vmatprep.subr.bf16.mxu0 0
    %1354 = vmatpush2.bf16.msra.mxu0 0
    %1355 = vmatprep.mubr.bf16.mxu0 0
    %1356 = vmatmul.mubr.bf16.gmra.mxu0 %v1318
    %v1357 = vpop.f32.mrf.mxu0
    %v1358 = vadd.f32 0.0, %v1357
    %v1359 = vpop.f32.mrf.mxu0
    %v1360 = vpop.f32.mrf.mxu0
    %v1361 = vpop.f32.mrf.mxu0
    %1362 = vdwg.mxu0
    %v1364 = vsel %vm296, %v1256, 0
    %v1367 = vsel %vm1273, %v279, 0
    %1369 = vmatprep.subr.bf16.mxu0 0
    %1370 = vmatpush1.bf16.msra.mxu0 0
    %1371 = vmatprep.subr.bf16.mxu0 0
    %1372 = vmatpush1.bf16.msra.mxu0 0
    %1373 = vmatprep.subr.bf16.mxu0 0
    %1374 = vmatpush1.bf16.msra.mxu0 0
    %1375 = vmatprep.subr.bf16.mxu0 0
    %1376 = vmatpush1.bf16.msra.mxu0 0
    %1377 = vmatprep.subr.bf16.mxu0 0
    %1378 = vmatpush1.bf16.msra.mxu0 0
    %1379 = vmatprep.subr.bf16.mxu0 0
    %1380 = vmatpush1.bf16.msra.mxu0 0
    %1381 = vmatprep.subr.bf16.mxu0 0
    %1382 = vmatpush1.bf16.msra.mxu0 0
    %1383 = vmatprep.subr.bf16.mxu0 0
    %1384 = vmatpush1.bf16.msra.mxu0 %v1367
    %1385 = vmatprep.subr.bf16.mxu0 0
    %1386 = vmatpush2.bf16.msra.mxu0 0
    %1387 = vmatprep.subr.bf16.mxu0 0
    %1388 = vmatpush2.bf16.msra.mxu0 0
    %1389 = vmatprep.subr.bf16.mxu0 0
    %1390 = vmatpush2.bf16.msra.mxu0 0
    %1391 = vmatprep.subr.bf16.mxu0 0
    %1392 = vmatpush2.bf16.msra.mxu0 0
    %1393 = vmatprep.subr.bf16.mxu0 0
    %1394 = vmatpush2.bf16.msra.mxu0 0
    %1395 = vmatprep.subr.bf16.mxu0 0
    %1396 = vmatpush2.bf16.msra.mxu0 0
    %1397 = vmatprep.subr.bf16.mxu0 0
    %1398 = vmatpush2.bf16.msra.mxu0 0
    %1399 = vmatprep.subr.bf16.mxu0 0
    %1400 = vmatpush2.bf16.msra.mxu0 0
    %1401 = vmatprep.mubr.bf16.mxu0 0
    %1402 = vmatmul.mubr.bf16.gmra.mxu0 %v1364
    %v1403 = vpop.f32.mrf.mxu0
    %v1404 = vadd.f32 0.0, %v1403
    %v1405 = vpop.f32.mrf.mxu0
    %v1406 = vpop.f32.mrf.mxu0
    %v1407 = vpop.f32.mrf.mxu0
    %1408 = vdwg.mxu0
    %v1410 = vsel %vm296, %v1257, 0
    %v1413 = vsel %vm1273, %v280, 0
    %1415 = vmatprep.subr.bf16.mxu0 0
    %1416 = vmatpush1.bf16.msra.mxu0 0
    %1417 = vmatprep.subr.bf16.mxu0 0
    %1418 = vmatpush1.bf16.msra.mxu0 0
    %1419 = vmatprep.subr.bf16.mxu0 0
    %1420 = vmatpush1.bf16.msra.mxu0 0
    %1421 = vmatprep.subr.bf16.mxu0 0
    %1422 = vmatpush1.bf16.msra.mxu0 0
    %1423 = vmatprep.subr.bf16.mxu0 0
    %1424 = vmatpush1.bf16.msra.mxu0 0
    %1425 = vmatprep.subr.bf16.mxu0 0
    %1426 = vmatpush1.bf16.msra.mxu0 0
    %1427 = vmatprep.subr.bf16.mxu0 0
    %1428 = vmatpush1.bf16.msra.mxu0 0
    %1429 = vmatprep.subr.bf16.mxu0 0
    %1430 = vmatpush1.bf16.msra.mxu0 %v1413
    %1431 = vmatprep.subr.bf16.mxu0 0
    %1432 = vmatpush2.bf16.msra.mxu0 0
    %1433 = vmatprep.subr.bf16.mxu0 0
    %1434 = vmatpush2.bf16.msra.mxu0 0
    %1435 = vmatprep.subr.bf16.mxu0 0
    %1436 = vmatpush2.bf16.msra.mxu0 0
    %1437 = vmatprep.subr.bf16.mxu0 0
    %1438 = vmatpush2.bf16.msra.mxu0 0
    %1439 = vmatprep.subr.bf16.mxu0 0
    %1440 = vmatpush2.bf16.msra.mxu0 0
    %1441 = vmatprep.subr.bf16.mxu0 0
    %1442 = vmatpush2.bf16.msra.mxu0 0
    %1443 = vmatprep.subr.bf16.mxu0 0
    %1444 = vmatpush2.bf16.msra.mxu0 0
    %1445 = vmatprep.subr.bf16.mxu0 0
    %1446 = vmatpush2.bf16.msra.mxu0 0
    %1447 = vmatprep.mubr.bf16.mxu0 0
    %1448 = vmatmul.mubr.bf16.gmra.mxu0 %v1410
    %v1449 = vpop.f32.mrf.mxu0
    %v1450 = vadd.f32 0.0, %v1449
    %v1451 = vpop.f32.mrf.mxu0
    %v1452 = vpop.f32.mrf.mxu0
    %v1453 = vpop.f32.mrf.mxu0
    %1454 = vdwg.mxu0
    %v1456 = vsel %vm296, %v1258, 0
    %v1459 = vsel %vm1273, %v281, 0
    %1461 = vmatprep.subr.bf16.mxu0 0
    %1462 = vmatpush1.bf16.msra.mxu0 0
    %1463 = vmatprep.subr.bf16.mxu0 0
    %1464 = vmatpush1.bf16.msra.mxu0 0
    %1465 = vmatprep.subr.bf16.mxu0 0
    %1466 = vmatpush1.bf16.msra.mxu0 0
    %1467 = vmatprep.subr.bf16.mxu0 0
    %1468 = vmatpush1.bf16.msra.mxu0 0
    %1469 = vmatprep.subr.bf16.mxu0 0
    %1470 = vmatpush1.bf16.msra.mxu0 0
    %1471 = vmatprep.subr.bf16.mxu0 0
    %1472 = vmatpush1.bf16.msra.mxu0 0
    %1473 = vmatprep.subr.bf16.mxu0 0
    %1474 = vmatpush1.bf16.msra.mxu0 0
    %1475 = vmatprep.subr.bf16.mxu0 0
    %1476 = vmatpush1.bf16.msra.mxu0 %v1459
    %1477 = vmatprep.subr.bf16.mxu0 0
    %1478 = vmatpush2.bf16.msra.mxu0 0
    %1479 = vmatprep.subr.bf16.mxu0 0
    %1480 = vmatpush2.bf16.msra.mxu0 0
    %1481 = vmatprep.subr.bf16.mxu0 0
    %1482 = vmatpush2.bf16.msra.mxu0 0
    %1483 = vmatprep.subr.bf16.mxu0 0
    %1484 = vmatpush2.bf16.msra.mxu0 0
    %1485 = vmatprep.subr.bf16.mxu0 0
    %1486 = vmatpush2.bf16.msra.mxu0 0
    %1487 = vmatprep.subr.bf16.mxu0 0
    %1488 = vmatpush2.bf16.msra.mxu0 0
    %1489 = vmatprep.subr.bf16.mxu0 0
    %1490 = vmatpush2.bf16.msra.mxu0 0
    %1491 = vmatprep.subr.bf16.mxu0 0
    %1492 = vmatpush2.bf16.msra.mxu0 0
    %1493 = vmatprep.mubr.bf16.mxu0 0
    %1494 = vmatmul.mubr.bf16.gmra.mxu0 %v1456
    %v1495 = vpop.f32.mrf.mxu0
    %v1496 = vadd.f32 0.0, %v1495
    %v1497 = vpop.f32.mrf.mxu0
    %v1498 = vpop.f32.mrf.mxu0
    %v1499 = vpop.f32.mrf.mxu0
    %1500 = vdwg.mxu0
    %v1502 = vsel %vm296, %v1259, 0
    %v1505 = vsel %vm1273, %v282, 0
    %1507 = vmatprep.subr.bf16.mxu0 0
    %1508 = vmatpush1.bf16.msra.mxu0 0
    %1509 = vmatprep.subr.bf16.mxu0 0
    %1510 = vmatpush1.bf16.msra.mxu0 0
    %1511 = vmatprep.subr.bf16.mxu0 0
    %1512 = vmatpush1.bf16.msra.mxu0 0
    %1513 = vmatprep.subr.bf16.mxu0 0
    %1514 = vmatpush1.bf16.msra.mxu0 0
    %1515 = vmatprep.subr.bf16.mxu0 0
    %1516 = vmatpush1.bf16.msra.mxu0 0
    %1517 = vmatprep.subr.bf16.mxu0 0
    %1518 = vmatpush1.bf16.msra.mxu0 0
    %1519 = vmatprep.subr.bf16.mxu0 0
    %1520 = vmatpush1.bf16.msra.mxu0 0
    %1521 = vmatprep.subr.bf16.mxu0 0
    %1522 = vmatpush1.bf16.msra.mxu0 %v1505
    %1523 = vmatprep.subr.bf16.mxu0 0
    %1524 = vmatpush2.bf16.msra.mxu0 0
    %1525 = vmatprep.subr.bf16.mxu0 0
    %1526 = vmatpush2.bf16.msra.mxu0 0
    %1527 = vmatprep.subr.bf16.mxu0 0
    %1528 = vmatpush2.bf16.msra.mxu0 0
    %1529 = vmatprep.subr.bf16.mxu0 0
    %1530 = vmatpush2.bf16.msra.mxu0 0
    %1531 = vmatprep.subr.bf16.mxu0 0
    %1532 = vmatpush2.bf16.msra.mxu0 0
    %1533 = vmatprep.subr.bf16.mxu0 0
    %1534 = vmatpush2.bf16.msra.mxu0 0
    %1535 = vmatprep.subr.bf16.mxu0 0
    %1536 = vmatpush2.bf16.msra.mxu0 0
    %1537 = vmatprep.subr.bf16.mxu0 0
    %1538 = vmatpush2.bf16.msra.mxu0 0
    %1539 = vmatprep.mubr.bf16.mxu0 0
    %1540 = vmatmul.mubr.bf16.gmra.mxu0 %v1502
    %v1541 = vpop.f32.mrf.mxu0
    %v1542 = vadd.f32 0.0, %v1541
    %v1543 = vpop.f32.mrf.mxu0
    %v1544 = vpop.f32.mrf.mxu0
    %v1545 = vpop.f32.mrf.mxu0
    %1546 = vdwg.mxu0
    %v1548 = vsel %vm296, %v1260, 0
    %v1551 = vsel %vm1273, %v283, 0
    %1553 = vmatprep.subr.bf16.mxu0 0
    %1554 = vmatpush1.bf16.msra.mxu0 0
    %1555 = vmatprep.subr.bf16.mxu0 0
    %1556 = vmatpush1.bf16.msra.mxu0 0
    %1557 = vmatprep.subr.bf16.mxu0 0
    %1558 = vmatpush1.bf16.msra.mxu0 0
    %1559 = vmatprep.subr.bf16.mxu0 0
    %1560 = vmatpush1.bf16.msra.mxu0 0
    %1561 = vmatprep.subr.bf16.mxu0 0
    %1562 = vmatpush1.bf16.msra.mxu0 0
    %1563 = vmatprep.subr.bf16.mxu0 0
    %1564 = vmatpush1.bf16.msra.mxu0 0
    %1565 = vmatprep.subr.bf16.mxu0 0
    %1566 = vmatpush1.bf16.msra.mxu0 0
    %1567 = vmatprep.subr.bf16.mxu0 0
    %1568 = vmatpush1.bf16.msra.mxu0 %v1551
    %1569 = vmatprep.subr.bf16.mxu0 0
    %1570 = vmatpush2.bf16.msra.mxu0 0
    %1571 = vmatprep.subr.bf16.mxu0 0
    %1572 = vmatpush2.bf16.msra.mxu0 0
    %1573 = vmatprep.subr.bf16.mxu0 0
    %1574 = vmatpush2.bf16.msra.mxu0 0
    %1575 = vmatprep.subr.bf16.mxu0 0
    %1576 = vmatpush2.bf16.msra.mxu0 0
    %1577 = vmatprep.subr.bf16.mxu0 0
    %1578 = vmatpush2.bf16.msra.mxu0 0
    %1579 = vmatprep.subr.bf16.mxu0 0
    %1580 = vmatpush2.bf16.msra.mxu0 0
    %1581 = vmatprep.subr.bf16.mxu0 0
    %1582 = vmatpush2.bf16.msra.mxu0 0
    %1583 = vmatprep.subr.bf16.mxu0 0
    %1584 = vmatpush2.bf16.msra.mxu0 0
    %1585 = vmatprep.mubr.bf16.mxu0 0
    %1586 = vmatmul.mubr.bf16.gmra.mxu0 %v1548
    %v1587 = vpop.f32.mrf.mxu0
    %v1588 = vadd.f32 0.0, %v1587
    %v1589 = vpop.f32.mrf.mxu0
    %v1590 = vpop.f32.mrf.mxu0
    %v1591 = vpop.f32.mrf.mxu0
    %1592 = vdwg.mxu0
    %v1594 = vsel %vm296, %v1261, 0
    %v1597 = vsel %vm1273, %v284, 0
    %1599 = vmatprep.subr.bf16.mxu0 0
    %1600 = vmatpush1.bf16.msra.mxu0 0
    %1601 = vmatprep.subr.bf16.mxu0 0
    %1602 = vmatpush1.bf16.msra.mxu0 0
    %1603 = vmatprep.subr.bf16.mxu0 0
    %1604 = vmatpush1.bf16.msra.mxu0 0
    %1605 = vmatprep.subr.bf16.mxu0 0
    %1606 = vmatpush1.bf16.msra.mxu0 0
    %1607 = vmatprep.subr.bf16.mxu0 0
    %1608 = vmatpush1.bf16.msra.mxu0 0
    %1609 = vmatprep.subr.bf16.mxu0 0
    %1610 = vmatpush1.bf16.msra.mxu0 0
    %1611 = vmatprep.subr.bf16.mxu0 0
    %1612 = vmatpush1.bf16.msra.mxu0 0
    %1613 = vmatprep.subr.bf16.mxu0 0
    %1614 = vmatpush1.bf16.msra.mxu0 %v1597
    %1615 = vmatprep.subr.bf16.mxu0 0
    %1616 = vmatpush2.bf16.msra.mxu0 0
    %1617 = vmatprep.subr.bf16.mxu0 0
    %1618 = vmatpush2.bf16.msra.mxu0 0
    %1619 = vmatprep.subr.bf16.mxu0 0
    %1620 = vmatpush2.bf16.msra.mxu0 0
    %1621 = vmatprep.subr.bf16.mxu0 0
    %1622 = vmatpush2.bf16.msra.mxu0 0
    %1623 = vmatprep.subr.bf16.mxu0 0
    %1624 = vmatpush2.bf16.msra.mxu0 0
    %1625 = vmatprep.subr.bf16.mxu0 0
    %1626 = vmatpush2.bf16.msra.mxu0 0
    %1627 = vmatprep.subr.bf16.mxu0 0
    %1628 = vmatpush2.bf16.msra.mxu0 0
    %1629 = vmatprep.subr.bf16.mxu0 0
    %1630 = vmatpush2.bf16.msra.mxu0 0
    %1631 = vmatprep.mubr.bf16.mxu0 0
    %1632 = vmatmul.mubr.bf16.gmra.mxu0 %v1594
    %v1633 = vpop.f32.mrf.mxu0
    %v1634 = vadd.f32 0.0, %v1633
    %v1635 = vpop.f32.mrf.mxu0
    %v1636 = vpop.f32.mrf.mxu0
    %v1637 = vpop.f32.mrf.mxu0
    %1638 = vdwg.mxu0
    %v1640 = vsel %vm296, %v1262, 0
    %v1643 = vsel %vm1273, %v285, 0
    %1645 = vmatprep.subr.bf16.mxu0 0
    %1646 = vmatpush1.bf16.msra.mxu0 0
    %1647 = vmatprep.subr.bf16.mxu0 0
    %1648 = vmatpush1.bf16.msra.mxu0 0
    %1649 = vmatprep.subr.bf16.mxu0 0
    %1650 = vmatpush1.bf16.msra.mxu0 0
    %1651 = vmatprep.subr.bf16.mxu0 0
    %1652 = vmatpush1.bf16.msra.mxu0 0
    %1653 = vmatprep.subr.bf16.mxu0 0
    %1654 = vmatpush1.bf16.msra.mxu0 0
    %1655 = vmatprep.subr.bf16.mxu0 0
    %1656 = vmatpush1.bf16.msra.mxu0 0
    %1657 = vmatprep.subr.bf16.mxu0 0
    %1658 = vmatpush1.bf16.msra.mxu0 0
    %1659 = vmatprep.subr.bf16.mxu0 0
    %1660 = vmatpush1.bf16.msra.mxu0 %v1643
    %1661 = vmatprep.subr.bf16.mxu0 0
    %1662 = vmatpush2.bf16.msra.mxu0 0
    %1663 = vmatprep.subr.bf16.mxu0 0
    %1664 = vmatpush2.bf16.msra.mxu0 0
    %1665 = vmatprep.subr.bf16.mxu0 0
    %1666 = vmatpush2.bf16.msra.mxu0 0
    %1667 = vmatprep.subr.bf16.mxu0 0
    %1668 = vmatpush2.bf16.msra.mxu0 0
    %1669 = vmatprep.subr.bf16.mxu0 0
    %1670 = vmatpush2.bf16.msra.mxu0 0
    %1671 = vmatprep.subr.bf16.mxu0 0
    %1672 = vmatpush2.bf16.msra.mxu0 0
    %1673 = vmatprep.subr.bf16.mxu0 0
    %1674 = vmatpush2.bf16.msra.mxu0 0
    %1675 = vmatprep.subr.bf16.mxu0 0
    %1676 = vmatpush2.bf16.msra.mxu0 0
    %1677 = vmatprep.mubr.bf16.mxu0 0
    %1678 = vmatmul.mubr.bf16.gmra.mxu0 %v1640
    %v1679 = vpop.f32.mrf.mxu0
    %v1680 = vadd.f32 0.0, %v1679
    %v1681 = vpop.f32.mrf.mxu0
    %v1682 = vpop.f32.mrf.mxu0
    %v1683 = vpop.f32.mrf.mxu0
    %1684 = vdwg.mxu0
    %v1686 = vsel %vm296, %v1263, 0
    %v1689 = vsel %vm1273, %v286, 0
    %1691 = vmatprep.subr.bf16.mxu0 0
    %1692 = vmatpush1.bf16.msra.mxu0 0
    %1693 = vmatprep.subr.bf16.mxu0 0
    %1694 = vmatpush1.bf16.msra.mxu0 0
    %1695 = vmatprep.subr.bf16.mxu0 0
    %1696 = vmatpush1.bf16.msra.mxu0 0
    %1697 = vmatprep.subr.bf16.mxu0 0
    %1698 = vmatpush1.bf16.msra.mxu0 0
    %1699 = vmatprep.subr.bf16.mxu0 0
    %1700 = vmatpush1.bf16.msra.mxu0 0
    %1701 = vmatprep.subr.bf16.mxu0 0
    %1702 = vmatpush1.bf16.msra.mxu0 0
    %1703 = vmatprep.subr.bf16.mxu0 0
    %1704 = vmatpush1.bf16.msra.mxu0 0
    %1705 = vmatprep.subr.bf16.mxu0 0
    %1706 = vmatpush1.bf16.msra.mxu0 %v1689
    %1707 = vmatprep.subr.bf16.mxu0 0
    %1708 = vmatpush2.bf16.msra.mxu0 0
    %1709 = vmatprep.subr.bf16.mxu0 0
    %1710 = vmatpush2.bf16.msra.mxu0 0
    %1711 = vmatprep.subr.bf16.mxu0 0
    %1712 = vmatpush2.bf16.msra.mxu0 0
    %1713 = vmatprep.subr.bf16.mxu0 0
    %1714 = vmatpush2.bf16.msra.mxu0 0
    %1715 = vmatprep.subr.bf16.mxu0 0
    %1716 = vmatpush2.bf16.msra.mxu0 0
    %1717 = vmatprep.subr.bf16.mxu0 0
    %1718 = vmatpush2.bf16.msra.mxu0 0
    %1719 = vmatprep.subr.bf16.mxu0 0
    %1720 = vmatpush2.bf16.msra.mxu0 0
    %1721 = vmatprep.subr.bf16.mxu0 0
    %1722 = vmatpush2.bf16.msra.mxu0 0
    %1723 = vmatprep.mubr.bf16.mxu0 0
    %1724 = vmatmul.mubr.bf16.gmra.mxu0 %v1686
    %v1725 = vpop.f32.mrf.mxu0
    %v1726 = vadd.f32 0.0, %v1725
    %v1727 = vpop.f32.mrf.mxu0
    %v1728 = vpop.f32.mrf.mxu0
    %v1729 = vpop.f32.mrf.mxu0
    %1730 = vdwg.mxu0
    %v1732 = vsel %vm296, %v1264, 0
    %v1735 = vsel %vm1273, %v287, 0
    %1737 = vmatprep.subr.bf16.mxu0 0
    %1738 = vmatpush1.bf16.msra.mxu0 0
    %1739 = vmatprep.subr.bf16.mxu0 0
    %1740 = vmatpush1.bf16.msra.mxu0 0
    %1741 = vmatprep.subr.bf16.mxu0 0
    %1742 = vmatpush1.bf16.msra.mxu0 0
    %1743 = vmatprep.subr.bf16.mxu0 0
    %1744 = vmatpush1.bf16.msra.mxu0 0
    %1745 = vmatprep.subr.bf16.mxu0 0
    %1746 = vmatpush1.bf16.msra.mxu0 0
    %1747 = vmatprep.subr.bf16.mxu0 0
    %1748 = vmatpush1.bf16.msra.mxu0 0
    %1749 = vmatprep.subr.bf16.mxu0 0
    %1750 = vmatpush1.bf16.msra.mxu0 0
    %1751 = vmatprep.subr.bf16.mxu0 0
    %1752 = vmatpush1.bf16.msra.mxu0 %v1735
    %1753 = vmatprep.subr.bf16.mxu0 0
    %1754 = vmatpush2.bf16.msra.mxu0 0
    %1755 = vmatprep.subr.bf16.mxu0 0
    %1756 = vmatpush2.bf16.msra.mxu0 0
    %1757 = vmatprep.subr.bf16.mxu0 0
    %1758 = vmatpush2.bf16.msra.mxu0 0
    %1759 = vmatprep.subr.bf16.mxu0 0
    %1760 = vmatpush2.bf16.msra.mxu0 0
    %1761 = vmatprep.subr.bf16.mxu0 0
    %1762 = vmatpush2.bf16.msra.mxu0 0
    %1763 = vmatprep.subr.bf16.mxu0 0
    %1764 = vmatpush2.bf16.msra.mxu0 0
    %1765 = vmatprep.subr.bf16.mxu0 0
    %1766 = vmatpush2.bf16.msra.mxu0 0
    %1767 = vmatprep.subr.bf16.mxu0 0
    %1768 = vmatpush2.bf16.msra.mxu0 0
    %1769 = vmatprep.mubr.bf16.mxu0 0
    %1770 = vmatmul.mubr.bf16.gmra.mxu0 %v1732
    %v1771 = vpop.f32.mrf.mxu0
    %v1772 = vadd.f32 0.0, %v1771
    %v1773 = vpop.f32.mrf.mxu0
    %v1774 = vpop.f32.mrf.mxu0
    %v1775 = vpop.f32.mrf.mxu0
    %1776 = vdwg.mxu0
    %v1778 = vsel %vm296, %v1265, 0
    %v1781 = vsel %vm1273, %v288, 0
    %1783 = vmatprep.subr.bf16.mxu0 0
    %1784 = vmatpush1.bf16.msra.mxu0 0
    %1785 = vmatprep.subr.bf16.mxu0 0
    %1786 = vmatpush1.bf16.msra.mxu0 0
    %1787 = vmatprep.subr.bf16.mxu0 0
    %1788 = vmatpush1.bf16.msra.mxu0 0
    %1789 = vmatprep.subr.bf16.mxu0 0
    %1790 = vmatpush1.bf16.msra.mxu0 0
    %1791 = vmatprep.subr.bf16.mxu0 0
    %1792 = vmatpush1.bf16.msra.mxu0 0
    %1793 = vmatprep.subr.bf16.mxu0 0
    %1794 = vmatpush1.bf16.msra.mxu0 0
    %1795 = vmatprep.subr.bf16.mxu0 0
    %1796 = vmatpush1.bf16.msra.mxu0 0
    %1797 = vmatprep.subr.bf16.mxu0 0
    %1798 = vmatpush1.bf16.msra.mxu0 %v1781
    %1799 = vmatprep.subr.bf16.mxu0 0
    %1800 = vmatpush2.bf16.msra.mxu0 0
    %1801 = vmatprep.subr.bf16.mxu0 0
    %1802 = vmatpush2.bf16.msra.mxu0 0
    %1803 = vmatprep.subr.bf16.mxu0 0
    %1804 = vmatpush2.bf16.msra.mxu0 0
    %1805 = vmatprep.subr.bf16.mxu0 0
    %1806 = vmatpush2.bf16.msra.mxu0 0
    %1807 = vmatprep.subr.bf16.mxu0 0
    %1808 = vmatpush2.bf16.msra.mxu0 0
    %1809 = vmatprep.subr.bf16.mxu0 0
    %1810 = vmatpush2.bf16.msra.mxu0 0
    %1811 = vmatprep.subr.bf16.mxu0 0
    %1812 = vmatpush2.bf16.msra.mxu0 0
    %1813 = vmatprep.subr.bf16.mxu0 0
    %1814 = vmatpush2.bf16.msra.mxu0 0
    %1815 = vmatprep.mubr.bf16.mxu0 0
    %1816 = vmatmul.mubr.bf16.gmra.mxu0 %v1778
    %v1817 = vpop.f32.mrf.mxu0
    %v1818 = vadd.f32 0.0, %v1817
    %v1819 = vpop.f32.mrf.mxu0
    %v1820 = vpop.f32.mrf.mxu0
    %v1821 = vpop.f32.mrf.mxu0
    %1822 = vdwg.mxu0
    %v1824 = vsel %vm296, %v1266, 0
    %v1827 = vsel %vm1273, %v289, 0
    %1829 = vmatprep.subr.bf16.mxu0 0
    %1830 = vmatpush1.bf16.msra.mxu0 0
    %1831 = vmatprep.subr.bf16.mxu0 0
    %1832 = vmatpush1.bf16.msra.mxu0 0
    %1833 = vmatprep.subr.bf16.mxu0 0
    %1834 = vmatpush1.bf16.msra.mxu0 0
    %1835 = vmatprep.subr.bf16.mxu0 0
    %1836 = vmatpush1.bf16.msra.mxu0 0
    %1837 = vmatprep.subr.bf16.mxu0 0
    %1838 = vmatpush1.bf16.msra.mxu0 0
    %1839 = vmatprep.subr.bf16.mxu0 0
    %1840 = vmatpush1.bf16.msra.mxu0 0
    %1841 = vmatprep.subr.bf16.mxu0 0
    %1842 = vmatpush1.bf16.msra.mxu0 0
    %1843 = vmatprep.subr.bf16.mxu0 0
    %1844 = vmatpush1.bf16.msra.mxu0 %v1827
    %1845 = vmatprep.subr.bf16.mxu0 0
    %1846 = vmatpush2.bf16.msra.mxu0 0
    %1847 = vmatprep.subr.bf16.mxu0 0
    %1848 = vmatpush2.bf16.msra.mxu0 0
    %1849 = vmatprep.subr.bf16.mxu0 0
    %1850 = vmatpush2.bf16.msra.mxu0 0
    %1851 = vmatprep.subr.bf16.mxu0 0
    %1852 = vmatpush2.bf16.msra.mxu0 0
    %1853 = vmatprep.subr.bf16.mxu0 0
    %1854 = vmatpush2.bf16.msra.mxu0 0
    %1855 = vmatprep.subr.bf16.mxu0 0
    %1856 = vmatpush2.bf16.msra.mxu0 0
    %1857 = vmatprep.subr.bf16.mxu0 0
    %1858 = vmatpush2.bf16.msra.mxu0 0
    %1859 = vmatprep.subr.bf16.mxu0 0
    %1860 = vmatpush2.bf16.msra.mxu0 0
    %1861 = vmatprep.mubr.bf16.mxu0 0
    %1862 = vmatmul.mubr.bf16.gmra.mxu0 %v1824
    %v1863 = vpop.f32.mrf.mxu0
    %v1864 = vadd.f32 0.0, %v1863
    %v1865 = vpop.f32.mrf.mxu0
    %v1866 = vpop.f32.mrf.mxu0
    %v1867 = vpop.f32.mrf.mxu0
    %1868 = vdwg.mxu0
    %v1870 = vsel %vm296, %v1267, 0
    %v1873 = vsel %vm1273, %v290, 0
    %1875 = vmatprep.subr.bf16.mxu0 0
    %1876 = vmatpush1.bf16.msra.mxu0 0
    %1877 = vmatprep.subr.bf16.mxu0 0
    %1878 = vmatpush1.bf16.msra.mxu0 0
    %1879 = vmatprep.subr.bf16.mxu0 0
    %1880 = vmatpush1.bf16.msra.mxu0 0
    %1881 = vmatprep.subr.bf16.mxu0 0
    %1882 = vmatpush1.bf16.msra.mxu0 0
    %1883 = vmatprep.subr.bf16.mxu0 0
    %1884 = vmatpush1.bf16.msra.mxu0 0
    %1885 = vmatprep.subr.bf16.mxu0 0
    %1886 = vmatpush1.bf16.msra.mxu0 0
    %1887 = vmatprep.subr.bf16.mxu0 0
    %1888 = vmatpush1.bf16.msra.mxu0 0
    %1889 = vmatprep.subr.bf16.mxu0 0
    %1890 = vmatpush1.bf16.msra.mxu0 %v1873
    %1891 = vmatprep.subr.bf16.mxu0 0
    %1892 = vmatpush2.bf16.msra.mxu0 0
    %1893 = vmatprep.subr.bf16.mxu0 0
    %1894 = vmatpush2.bf16.msra.mxu0 0
    %1895 = vmatprep.subr.bf16.mxu0 0
    %1896 = vmatpush2.bf16.msra.mxu0 0
    %1897 = vmatprep.subr.bf16.mxu0 0
    %1898 = vmatpush2.bf16.msra.mxu0 0
    %1899 = vmatprep.subr.bf16.mxu0 0
    %1900 = vmatpush2.bf16.msra.mxu0 0
    %1901 = vmatprep.subr.bf16.mxu0 0
    %1902 = vmatpush2.bf16.msra.mxu0 0
    %1903 = vmatprep.subr.bf16.mxu0 0
    %1904 = vmatpush2.bf16.msra.mxu0 0
    %1905 = vmatprep.subr.bf16.mxu0 0
    %1906 = vmatpush2.bf16.msra.mxu0 0
    %1907 = vmatprep.mubr.bf16.mxu0 0
    %1908 = vmatmul.mubr.bf16.gmra.mxu0 %v1870
    %v1909 = vpop.f32.mrf.mxu0
    %v1910 = vadd.f32 0.0, %v1909
    %v1911 = vpop.f32.mrf.mxu0
    %v1912 = vpop.f32.mrf.mxu0
    %v1913 = vpop.f32.mrf.mxu0
    %1914 = vdwg.mxu0
    %v1916 = vsel %vm296, %v1268, 0
    %v1919 = vsel %vm1273, %v291, 0
    %1921 = vmatprep.subr.bf16.mxu0 0
    %1922 = vmatpush1.bf16.msra.mxu0 0
    %1923 = vmatprep.subr.bf16.mxu0 0
    %1924 = vmatpush1.bf16.msra.mxu0 0
    %1925 = vmatprep.subr.bf16.mxu0 0
    %1926 = vmatpush1.bf16.msra.mxu0 0
    %1927 = vmatprep.subr.bf16.mxu0 0
    %1928 = vmatpush1.bf16.msra.mxu0 0
    %1929 = vmatprep.subr.bf16.mxu0 0
    %1930 = vmatpush1.bf16.msra.mxu0 0
    %1931 = vmatprep.subr.bf16.mxu0 0
    %1932 = vmatpush1.bf16.msra.mxu0 0
    %1933 = vmatprep.subr.bf16.mxu0 0
    %1934 = vmatpush1.bf16.msra.mxu0 0
    %1935 = vmatprep.subr.bf16.mxu0 0
    %1936 = vmatpush1.bf16.msra.mxu0 %v1919
    %1937 = vmatprep.subr.bf16.mxu0 0
    %1938 = vmatpush2.bf16.msra.mxu0 0
    %1939 = vmatprep.subr.bf16.mxu0 0
    %1940 = vmatpush2.bf16.msra.mxu0 0
    %1941 = vmatprep.subr.bf16.mxu0 0
    %1942 = vmatpush2.bf16.msra.mxu0 0
    %1943 = vmatprep.subr.bf16.mxu0 0
    %1944 = vmatpush2.bf16.msra.mxu0 0
    %1945 = vmatprep.subr.bf16.mxu0 0
    %1946 = vmatpush2.bf16.msra.mxu0 0
    %1947 = vmatprep.subr.bf16.mxu0 0
    %1948 = vmatpush2.bf16.msra.mxu0 0
    %1949 = vmatprep.subr.bf16.mxu0 0
    %1950 = vmatpush2.bf16.msra.mxu0 0
    %1951 = vmatprep.subr.bf16.mxu0 0
    %1952 = vmatpush2.bf16.msra.mxu0 0
    %1953 = vmatprep.mubr.bf16.mxu0 0
    %1954 = vmatmul.mubr.bf16.gmra.mxu0 %v1916
    %v1955 = vpop.f32.mrf.mxu0
    %v1956 = vadd.f32 0.0, %v1955
    %v1957 = vpop.f32.mrf.mxu0
    %v1958 = vpop.f32.mrf.mxu0
    %v1959 = vpop.f32.mrf.mxu0
    %1960 = vdwg.mxu0
    %v1962 = vsel %vm296, %v1269, 0
    %v1965 = vsel %vm1273, %v292, 0
    %1967 = vmatprep.subr.bf16.mxu0 0
    %1968 = vmatpush1.bf16.msra.mxu0 0
    %1969 = vmatprep.subr.bf16.mxu0 0
    %1970 = vmatpush1.bf16.msra.mxu0 0
    %1971 = vmatprep.subr.bf16.mxu0 0
    %1972 = vmatpush1.bf16.msra.mxu0 0
    %1973 = vmatprep.subr.bf16.mxu0 0
    %1974 = vmatpush1.bf16.msra.mxu0 0
    %1975 = vmatprep.subr.bf16.mxu0 0
    %1976 = vmatpush1.bf16.msra.mxu0 0
    %1977 = vmatprep.subr.bf16.mxu0 0
    %1978 = vmatpush1.bf16.msra.mxu0 0
    %1979 = vmatprep.subr.bf16.mxu0 0
    %1980 = vmatpush1.bf16.msra.mxu0 0
    %1981 = vmatprep.subr.bf16.mxu0 0
    %1982 = vmatpush1.bf16.msra.mxu0 %v1965
    %1983 = vmatprep.subr.bf16.mxu0 0
    %1984 = vmatpush2.bf16.msra.mxu0 0
    %1985 = vmatprep.subr.bf16.mxu0 0
    %1986 = vmatpush2.bf16.msra.mxu0 0
    %1987 = vmatprep.subr.bf16.mxu0 0
    %1988 = vmatpush2.bf16.msra.mxu0 0
    %1989 = vmatprep.subr.bf16.mxu0 0
    %1990 = vmatpush2.bf16.msra.mxu0 0
    %1991 = vmatprep.subr.bf16.mxu0 0
    %1992 = vmatpush2.bf16.msra.mxu0 0
    %1993 = vmatprep.subr.bf16.mxu0 0
    %1994 = vmatpush2.bf16.msra.mxu0 0
    %1995 = vmatprep.subr.bf16.mxu0 0
    %1996 = vmatpush2.bf16.msra.mxu0 0
    %1997 = vmatprep.subr.bf16.mxu0 0
    %1998 = vmatpush2.bf16.msra.mxu0 0
    %1999 = vmatprep.mubr.bf16.mxu0 0
    %2000 = vmatmul.mubr.bf16.gmra.mxu0 %v1962
    %v2001 = vpop.f32.mrf.mxu0
    %v2002 = vadd.f32 0.0, %v2001
    %v2003 = vpop.f32.mrf.mxu0
    %v2004 = vpop.f32.mrf.mxu0
    %v2005 = vpop.f32.mrf.mxu0
    %2006 = vdwg.mxu0
    %2009 = vrot.lane.b32.xlu0 %v1404, 8
    %v2010 = vpop.permute.xlu0 %2009
    %2011 = vrot.lane.b32.xlu0 %v1450, 8
    %v2012 = vpop.permute.xlu0 %2011
    %2017 = vrot.lane.b32.xlu0 %v1496, 16
    %v2018 = vpop.permute.xlu0 %2017
    %2019 = vrot.lane.b32.xlu0 %v1542, 16
    %v2020 = vpop.permute.xlu0 %2019
    %2025 = vrot.lane.b32.xlu0 %v1588, 24
    %v2026 = vpop.permute.xlu0 %2025
    %2027 = vrot.lane.b32.xlu0 %v1634, 24
    %v2028 = vpop.permute.xlu0 %2027
    %2033 = vrot.lane.b32.xlu0 %v1680, 32
    %v2034 = vpop.permute.xlu0 %2033
    %2035 = vrot.lane.b32.xlu0 %v1726, 32
    %v2036 = vpop.permute.xlu0 %2035
    %2041 = vrot.lane.b32.xlu0 %v1772, 40
    %v2042 = vpop.permute.xlu0 %2041
    %2043 = vrot.lane.b32.xlu0 %v1818, 40
    %v2044 = vpop.permute.xlu0 %2043
    %2049 = vrot.lane.b32.xlu0 %v1864, 48
    %v2050 = vpop.permute.xlu0 %2049
    %2051 = vrot.lane.b32.xlu0 %v1910, 48
    %v2052 = vpop.permute.xlu0 %2051
    %2057 = vrot.lane.b32.xlu0 %v1956, 56
    %v2058 = vpop.permute.xlu0 %2057
    %2059 = vrot.lane.b32.xlu0 %v2002, 56
    %v2060 = vpop.permute.xlu0 %2059
    %v2063 = vsel %vm296, %v1312, %v2010
    %v2064 = vsel %vm296, %v1358, %v2012
    %vm2065 = vcmask 130048
    %v2066 = vsel %vm2065, %v2063, %v2018
    %v2067 = vsel %vm2065, %v2064, %v2020
    %vm2068 = vcmask 195584
    %v2069 = vsel %vm2068, %v2066, %v2026
    %v2070 = vsel %vm2068, %v2067, %v2028
    %vm2071 = vcmask 261120
    %v2072 = vsel %vm2071, %v2069, %v2034
    %v2073 = vsel %vm2071, %v2070, %v2036
    %vm2074 = vcmask 326656
    %v2075 = vsel %vm2074, %v2072, %v2042
    %v2076 = vsel %vm2074, %v2073, %v2044
    %vm2077 = vcmask 392192
    %v2078 = vsel %vm2077, %v2075, %v2050
    %v2079 = vsel %vm2077, %v2076, %v2052
    %vm2080 = vcmask 457728
    %v2081 = vsel %vm2080, %v2078, %v2058
    %v2082 = vsel %vm2080, %v2079, %v2060
    %v2083 = vpack.c.bf16 %v2082, %v2081
    %v2084 = vld [vmem:[#allocation7] sm:$0xf]
    %v2085 = vld [vmem:[#allocation7 + $0x4] sm:$0xf]
    %v2086 = vld [vmem:[#allocation7 + $0x8] sm:$0xf]
    %v2087 = vld [vmem:[#allocation7 + $0xc] sm:$0xf]
    %v2088 = vld [vmem:[#allocation7 + $0x10] sm:$0xf]
    %v2089 = vld [vmem:[#allocation7 + $0x14] sm:$0xf]
    %v2090 = vld [vmem:[#allocation7 + $0x18] sm:$0xf]
    %v2091 = vld [vmem:[#allocation7 + $0x1c] sm:$0xf]
    %v2092 = vld [vmem:[%s4] sm:$0x1]
    %v2094 = vlaneseq
    %v2095 = vshrl.u32 %v2094, 7
    %v2096 = vsub.s32 0, %v2095
    %v2097 = vrot.slane %v2092, %v2096
    %v2107 = vunpack.c.l.b16 %v2084
    %v2108 = vunpack.c.l.b16 %v2085
    %v2109 = vunpack.c.l.b16 %v2086
    %v2110 = vunpack.c.l.b16 %v2087
    %v2111 = vunpack.c.l.b16 %v2088
    %v2112 = vunpack.c.l.b16 %v2089
    %v2113 = vunpack.c.l.b16 %v2090
    %v2114 = vunpack.c.l.b16 %v2091
    %v2115 = vpack.c.b16 %v2108, %v2107
    %v2116 = vpack.c.b16 %v2110, %v2109
    %v2117 = vpack.c.b16 %v2112, %v2111
    %v2118 = vpack.c.b16 %v2114, %v2113
    %v2124 = vsel %vm126, %v2083, 0
    %2126 = vmatprep.subr.bf16.mxu0 0
    %2127 = vmatpush1.bf16.msra.mxu0 0
    %2128 = vmatprep.subr.bf16.mxu0 0
    %2129 = vmatpush1.bf16.msra.mxu0 0
    %2130 = vmatprep.subr.bf16.mxu0 0
    %2131 = vmatpush1.bf16.msra.mxu0 0
    %2132 = vmatprep.subr.bf16.mxu0 0
    %2133 = vmatpush1.bf16.msra.mxu0 0
    %2134 = vmatprep.subr.bf16.mxu0 0
    %2135 = vmatpush1.bf16.msra.mxu0 %v2118
    %2136 = vmatprep.subr.bf16.mxu0 0
    %2137 = vmatpush1.bf16.msra.mxu0 %v2117
    %2138 = vmatprep.subr.bf16.mxu0 0
    %2139 = vmatpush1.bf16.msra.mxu0 %v2116
    %2140 = vmatprep.subr.bf16.mxu0 0
    %2141 = vmatpush1.bf16.msra.mxu0 %v2115
    %2142 = vmatprep.subr.bf16.mxu0 0
    %2143 = vmatpush2.bf16.msra.mxu0 0
    %2144 = vmatprep.subr.bf16.mxu0 0
    %2145 = vmatpush2.bf16.msra.mxu0 0
    %2146 = vmatprep.subr.bf16.mxu0 0
    %2147 = vmatpush2.bf16.msra.mxu0 0
    %2148 = vmatprep.subr.bf16.mxu0 0
    %2149 = vmatpush2.bf16.msra.mxu0 0
    %2150 = vmatprep.subr.bf16.mxu0 0
    %2151 = vmatpush2.bf16.msra.mxu0 0
    %2152 = vmatprep.subr.bf16.mxu0 0
    %2153 = vmatpush2.bf16.msra.mxu0 0
    %2154 = vmatprep.subr.bf16.mxu0 0
    %2155 = vmatpush2.bf16.msra.mxu0 0
    %2156 = vmatprep.subr.bf16.mxu0 0
    %2157 = vmatpush2.bf16.msra.mxu0 0
    %2158 = vmatprep.mubr.bf16.mxu0 0
    %2159 = vmatmul.mubr.bf16.gmra.mxu0 %v2124
    %v2160 = vpop.f32.mrf.mxu0
    %v2161 = vadd.f32 %v2097, %v2160
    %v2162 = vpop.f32.mrf.mxu0
    %v2163 = vpop.f32.mrf.mxu0
    %v2164 = vadd.f32 %v2097, %v2163
    %v2165 = vpop.f32.mrf.mxu0
    %2166 = vdwg.mxu0
    %2167 = vst.msk [vmem:[#allocation8] sm:$0xff] %vm126, %v2161
    %2168 = vst.msk [vmem:[#allocation8 + $0x8] sm:$0xff] %vm126, %v2164
    // Predicated region
    $region34: #{tpu_custom_call.1} parent=1 // pred_check
      _
    $region35: #{tpu_custom_call.1} parent=1 // pred_check_branch
      %2170 = sbr.rel (0) target = $region37
    $region36: #{tpu_custom_call.1} parent=1 // pred_region
      %s2172 = ssub.s32 256, 256
      %2173 = vsyncadd [#allocation4], %s2172
      %s2174 = sshll.u32 [#allocation8], 4
      %s2175 = int_to_ptr.vmem [resolvable:$true] %s2174
      %2180 = dma.vmem_to_hbm [thread:$0]  %s2175, 256, %s5, [#allocation4], 128, 128, 8
    $region37: #{tpu_custom_call.1} parent=1 // pred_fallthru
      _
    // Predicated region
    $region38: #{tpu_custom_call.1} parent=1 // pred_check
      _
    $region39: #{tpu_custom_call.1} parent=1 // pred_check_branch
      %2182 = sbr.rel (0) target = $region41
    $region40: #{tpu_custom_call.1} parent=1 // pred_region
      %2183 = dma.done [#allocation4], 256
    $region41: #{tpu_custom_call.1} parent=1 // pred_fallthru
      _
    %2184 = vsyncpa [#allocation3], 1
    %2185 = vsyncpa [#allocation6], 1
    %2186 = vsyncpa [#allocation4], 1

</llo_original>
